<compile_context>
chip_gen: v5e
topology: v5e:2x2
jax: 0.10.0
libtpu: 0.0.40
codegen_flags: <defaults>
</compile_context>

<pallas_src>
import jax
import jax.numpy as jnp
from jax import lax
from jax.experimental import pallas as pl
from jax.experimental.pallas import tpu as pltpu

# Keep the pure-JAX reference and the in-kernel f32 MXU matmuls numerically
# aligned (default TPU f32 matmul precision is reduced).
jax.config.update("jax_default_matmul_precision", "highest")

TEMPERATURE = 0.07

NUM_USERS = 64
NUM_MOVIES = 64
NUM_GENDERS = 2
NUM_AGES = 7
NUM_JOBS = 21
NUM_GENRES = 18
EMB_DIM = 16
FEAT_DIM = 32

_LANE = 128     # output movie axis padded to this (lane-dense stores)
_SUBLANE = 8    # user axis padded to this


def _round_up(x, m):
    return ((x + m - 1) // m) * m


def _make_kernel(bu, bm, bu_p, bm_p):
    """Fused: gathers + genre matmul + tanh feature nets + softmax/T (both sides)
    + u @ m.T + final softmax, all in one invocation."""
    E = EMB_DIM
    inv_t2 = 1.0 / (TEMPERATURE * TEMPERATURE)   # Python float -> literal

    def kernel(uid_ref, ugen_ref, uage_ref, ujob_ref, mid_ref,     # SMEM prefetch
               uid_emb, gen_emb, age_emb, job_emb,                 # VMEM tables
               mid_emb, genre_w, mgenre, uw, mw,                   # VMEM inputs
               o_ref,                                              # output
               ue_sc, me_sc):                                      # VMEM scratch
        # Zero scratch: padded rows stay 0 -> tanh(0)=0 (sliced/masked away).
        ue_sc[...] = jnp.zeros_like(ue_sc)
        me_sc[...] = jnp.zeros_like(me_sc)

        # ---- fused embedding gathers (indices live in SMEM) -----------------
        # Tables are (N, 1, E): dynamic index on the untiled leading dim.
        for i in range(bu):                       # static trip count
            ue_sc[i:i + 1, 0:E]         = uid_emb[uid_ref[i]]
            ue_sc[i:i + 1, E:2 * E]     = gen_emb[ugen_ref[i]]
            ue_sc[i:i + 1, 2 * E:3 * E] = age_emb[uage_ref[i]]
            ue_sc[i:i + 1, 3 * E:4 * E] = job_emb[ujob_ref[i]]
        for j in range(bm):
            me_sc[j:j + 1, 0:E] = mid_emb[mid_ref[j]]
        # fused multi-hot genre projection
        me_sc[0:bm, E:2 * E] = jnp.dot(mgenre[...], genre_w[...],
                                       preferred_element_type=jnp.float32)

        # ---- feature nets: tanh(emb @ W)  (MXU + EUP) ------------------------
        u = jnp.tanh(jnp.dot(ue_sc[...], uw[...],
                             preferred_element_type=jnp.float32))   # (bu_p, D)
        m = jnp.tanh(jnp.dot(me_sc[...], mw[...],
                             preferred_element_type=jnp.float32))   # (bm_p, D)

        # ---- softmax(dim=1) / T on both sides --------------------------------
        # tanh bounds logits to [-1, 1]: no max-subtraction needed (saves two
        # XLU reduce-max passes on the serial chain).  Exact division here —
        # error would be amplified by 1/T^2 and then exponentiated.  The full
        # 1/T^2 is folded into the user-side column only.
        u_exp = jnp.exp(u)
        m_exp = jnp.exp(m)
        u_sm = u_exp * (inv_t2 / jnp.sum(u_exp, axis=1, keepdims=True))
        m_sm = m_exp / jnp.sum(m_exp, axis=1, keepdims=True)

        # ---- similarity: u_sm @ m_sm.T, no materialized transpose ------------
        sim = lax.dot_general(u_sm, m_sm,
                              dimension_numbers=(((1,), (1,)), ((), ())),
                              preferred_element_type=jnp.float32)   # (bu_p, bm_p)

        # Mask lane-padding columns (static trace-time mask).
        col = lax.broadcasted_iota(jnp.int32, (bu_p, bm_p), 1)
        sim = jnp.where(col < bm, sim, -1e30)

        # ---- final softmax over movies (keep max-sub; logits can reach ~1/T^2)
        s_exp = jnp.exp(sim - jnp.max(sim, axis=1, keepdims=True))
        o_ref[...] = s_exp * pl.reciprocal(
            jnp.sum(s_exp, axis=1, keepdims=True), approx=True)

    return kernel


def fused_recommender(params, user_id, user_gender, user_age, user_job,
                      movie_id, movie_genre):
    Bu = user_id.shape[0]
    Bm = movie_id.shape[0]
    bu_p = _round_up(max(Bu, _SUBLANE), _SUBLANE)
    bm_p = _round_up(max(Bm, _LANE), _LANE)       # lane-dense output stores

    kernel = _make_kernel(Bu, Bm, bu_p, bm_p)

    idx2 = lambda i, *prefetch: (0, 0)
    idx3 = lambda i, *prefetch: (0, 0, 0)

    grid_spec = pltpu.PrefetchScalarGridSpec(
        num_scalar_prefetch=5,                    # uid, gender, age, job, mid
        grid=(1,),
        in_specs=[
            pl.BlockSpec(params["uid_emb"].shape, idx3),
            pl.BlockSpec(params["gen_emb"].shape, idx3),
            pl.BlockSpec(params["age_emb"].shape, idx3),
            pl.BlockSpec(params["job_emb"].shape, idx3),
            pl.BlockSpec(params["mid_emb"].shape, idx3),
            pl.BlockSpec(params["genre_w"].shape, idx2),
            pl.BlockSpec((Bm, NUM_GENRES), idx2),
            pl.BlockSpec(params["user_w"].shape, idx2),
            pl.BlockSpec(params["movie_w"].shape, idx2),
        ],
        out_specs=pl.BlockSpec((bu_p, bm_p), idx2),
        scratch_shapes=[pltpu.VMEM((bu_p, 4 * EMB_DIM), jnp.float32),
                        pltpu.VMEM((bm_p, 2 * EMB_DIM), jnp.float32)],
    )

    out_p = pl.pallas_call(
        kernel,
        out_shape=jax.ShapeDtypeStruct((bu_p, bm_p), jnp.float32),
        grid_spec=grid_spec,
        compiler_params=pltpu.CompilerParams(
            dimension_semantics=("arbitrary",)),
    )(user_id.astype(jnp.int32), user_gender.astype(jnp.int32),
      user_age.astype(jnp.int32), user_job.astype(jnp.int32),
      movie_id.astype(jnp.int32),
      params["uid_emb"], params["gen_emb"], params["age_emb"],
      params["job_emb"], params["mid_emb"], params["genre_w"],
      movie_genre.astype(jnp.float32),
      params["user_w"], params["movie_w"])

    # TODO(synk): the only remaining HLO glue — slice off the lane/sublane pad.
    return out_p[:Bu, :Bm]


# -----------------------------------------------------------------------------
# Synthetic feature-net parameters (the PyTorch spec takes the feature nets as
# abstract submodules; these are embedding-table + Linear + tanh stand-ins).
# Embedding tables are stored (N, 1, EMB) = gather-friendly layout.
# -----------------------------------------------------------------------------
def init_params(key):
    ks = jax.random.split(key, 8)
    s = 0.1
    return {
        "uid_emb": s * jax.random.normal(ks[0], (NUM_USERS, 1, EMB_DIM), jnp.float32),
        "gen_emb": s * jax.random.normal(ks[1], (NUM_GENDERS, 1, EMB_DIM), jnp.float32),
        "age_emb": s * jax.random.normal(ks[2], (NUM_AGES, 1, EMB_DIM), jnp.float32),
        "job_emb": s * jax.random.normal(ks[3], (NUM_JOBS, 1, EMB_DIM), jnp.float32),
        "user_w":  s * jax.random.normal(ks[4], (4 * EMB_DIM, FEAT_DIM), jnp.float32),
        "mid_emb": s * jax.random.normal(ks[5], (NUM_MOVIES, 1, EMB_DIM), jnp.float32),
        "genre_w": s * jax.random.normal(ks[6], (NUM_GENRES, EMB_DIM), jnp.float32),
        "movie_w": s * jax.random.normal(ks[7], (2 * EMB_DIM, FEAT_DIM), jnp.float32),
    }


def recommender_forward(params, user_id, user_gender, user_age, user_job,
                        movie_id, movie_genre):
    return fused_recommender(params, user_id, user_gender, user_age, user_job,
                             movie_id, movie_genre)


def reference_forward(params, user_id, user_gender, user_age, user_job,
                      movie_id, movie_genre):
    ue = jnp.concatenate(
        [params["uid_emb"][user_id, 0],
         params["gen_emb"][user_gender, 0],
         params["age_emb"][user_age, 0],
         params["job_emb"][user_job, 0]], axis=1)
    me = jnp.concatenate(
        [params["mid_emb"][movie_id, 0],
         movie_genre.astype(jnp.float32) @ params["genre_w"]], axis=1)
    uf = jnp.tanh(ue @ params["user_w"])
    mf = jnp.tanh(me @ params["movie_w"])
    u = jax.nn.softmax(uf, axis=1) / TEMPERATURE
    m = jax.nn.softmax(mf, axis=1) / TEMPERATURE
    sim = u @ m.T
    return jax.nn.softmax(sim, axis=1)


if __name__ == "__main__":
    key = jax.random.PRNGKey(0)
    pkey, k1, k2, k3, k4, k5, k6 = jax.random.split(key, 7)
    params = init_params(pkey)

    Bu, Bm = 8, 8
    user_id = jax.random.randint(k1, (Bu,), 0, NUM_USERS, dtype=jnp.int32)
    user_gender = jax.random.randint(k2, (Bu,), 0, NUM_GENDERS, dtype=jnp.int32)
    user_age = jax.random.randint(k3, (Bu,), 0, NUM_AGES, dtype=jnp.int32)
    user_job = jax.random.randint(k4, (Bu,), 0, NUM_JOBS, dtype=jnp.int32)
    movie_id = jax.random.randint(k5, (Bm,), 0, NUM_MOVIES, dtype=jnp.int32)
    movie_genre = (jax.random.uniform(k6, (Bm, NUM_GENRES)) < 0.2).astype(jnp.float32)

    out = recommender_forward(params, user_id, user_gender, user_age, user_job,
                              movie_id, movie_genre)
    out = jax.block_until_ready(out)

    ref = reference_forward(params, user_id, user_gender, user_age, user_job,
                            movie_id, movie_genre)
    assert out.shape == (Bu, Bm)
    # approx=True reciprocal is only used for the final normalization
    # (~2^-12 relative error on probabilities <= 1).
    assert bool(jnp.allclose(out, ref, atol=2e-3, rtol=2e-3))

    print("KERNEL_OK")
</pallas_src>

<mosaic_0001>
module attributes {stable_mosaic.version = 11 : i64} {
  func.func @kernel(%arg0: i32, %arg1: memref<8xi32, #tpu.memory_space<smem>>, %arg2: memref<8xi32, #tpu.memory_space<smem>>, %arg3: memref<8xi32, #tpu.memory_space<smem>>, %arg4: memref<8xi32, #tpu.memory_space<smem>>, %arg5: memref<8xi32, #tpu.memory_space<smem>>, %arg6: memref<64x1x16xf32, #tpu.memory_space<vmem>>, %arg7: memref<2x1x16xf32, #tpu.memory_space<vmem>>, %arg8: memref<7x1x16xf32, #tpu.memory_space<vmem>>, %arg9: memref<21x1x16xf32, #tpu.memory_space<vmem>>, %arg10: memref<64x1x16xf32, #tpu.memory_space<vmem>>, %arg11: memref<18x16xf32, #tpu.memory_space<vmem>>, %arg12: memref<8x18xf32, #tpu.memory_space<vmem>>, %arg13: memref<64x32xf32, #tpu.memory_space<vmem>>, %arg14: memref<32x32xf32, #tpu.memory_space<vmem>>, %arg15: memref<8x128xf32, #tpu.memory_space<vmem>>, %arg16: memref<8x64xf32, #tpu.memory_space<vmem>>, %arg17: memref<128x32xf32, #tpu.memory_space<vmem>>) attributes {dimension_semantics = [#tpu.dimension_semantics<arbitrary>], iteration_bounds = array<i64: 1>, scalar_prefetch = 5 : i64, scratch_operands = 2 : i64, tpu.core_type = #tpu.core_type<tc>, window_params = [{pipeline_mode = #tpu.pipeline_mode<synchronous>, transform_indices = @transform_0, window_bounds = array<i64: 64, 1, 16>}, {pipeline_mode = #tpu.pipeline_mode<synchronous>, transform_indices = @transform_1, window_bounds = array<i64: 2, 1, 16>}, {pipeline_mode = #tpu.pipeline_mode<synchronous>, transform_indices = @transform_2, window_bounds = array<i64: 7, 1, 16>}, {pipeline_mode = #tpu.pipeline_mode<synchronous>, transform_indices = @transform_3, window_bounds = array<i64: 21, 1, 16>}, {pipeline_mode = #tpu.pipeline_mode<synchronous>, transform_indices = @transform_4, window_bounds = array<i64: 64, 1, 16>}, {pipeline_mode = #tpu.pipeline_mode<synchronous>, transform_indices = @transform_5, window_bounds = array<i64: 18, 16>}, {pipeline_mode = #tpu.pipeline_mode<synchronous>, transform_indices = @transform_6, window_bounds = array<i64: 8, 18>}, {pipeline_mode = #tpu.pipeline_mode<synchronous>, transform_indices = @transform_7, window_bounds = array<i64: 64, 32>}, {pipeline_mode = #tpu.pipeline_mode<synchronous>, transform_indices = @transform_8, window_bounds = array<i64: 32, 32>}, {pipeline_mode = #tpu.pipeline_mode<synchronous>, transform_indices = @transform_9, window_bounds = array<i64: 8, 128>}]} {
    %cst = arith.constant 0.000000e+00 : f32
    %0 = vector.broadcast %cst : f32 to vector<8x64xf32>
    %c0 = arith.constant 0 : index
    %c0_0 = arith.constant 0 : index
    %1 = vector.load %arg16[%c0, %c0_0] : memref<8x64xf32, #tpu.memory_space<vmem>>, vector<8x64xf32>
    tpu.vector_store %arg16[%c0, %c0_0], %0 {strides = array<i32>} : memref<8x64xf32, #tpu.memory_space<vmem>>, vector<8x64xf32>,
    %cst_1 = arith.constant 0.000000e+00 : f32
    %2 = vector.broadcast %cst_1 : f32 to vector<128x32xf32>
    %c0_2 = arith.constant 0 : index
    %c0_3 = arith.constant 0 : index
    %3 = vector.load %arg17[%c0_2, %c0_3] : memref<128x32xf32, #tpu.memory_space<vmem>>, vector<128x32xf32>
    tpu.vector_store %arg17[%c0_2, %c0_3], %2 {strides = array<i32>} : memref<128x32xf32, #tpu.memory_space<vmem>>, vector<128x32xf32>,
    %c0_4 = arith.constant 0 : index
    %4 = memref.load %arg1[%c0_4] : memref<8xi32, #tpu.memory_space<smem>>
    %5 = arith.index_cast %4 : i32 to index
    %c0_5 = arith.constant 0 : index
    %c0_6 = arith.constant 0 : index
    %6 = vector.load %arg6[%5, %c0_5, %c0_6] : memref<64x1x16xf32, #tpu.memory_space<vmem>>, vector<1x1x16xf32>
    %7 = vector.shape_cast %6 : vector<1x1x16xf32> to vector<1x16xf32>
    %c0_7 = arith.constant 0 : index
    %c0_8 = arith.constant 0 : index
    %8 = vector.load %arg16[%c0_7, %c0_8] : memref<8x64xf32, #tpu.memory_space<vmem>>, vector<1x16xf32>
    tpu.vector_store %arg16[%c0_7, %c0_8], %7 {strides = array<i32>} : memref<8x64xf32, #tpu.memory_space<vmem>>, vector<1x16xf32>,
    %c0_9 = arith.constant 0 : index
    %9 = memref.load %arg2[%c0_9] : memref<8xi32, #tpu.memory_space<smem>>
    %10 = arith.index_cast %9 : i32 to index
    %c0_10 = arith.constant 0 : index
    %c0_11 = arith.constant 0 : index
    %11 = vector.load %arg7[%10, %c0_10, %c0_11] : memref<2x1x16xf32, #tpu.memory_space<vmem>>, vector<1x1x16xf32>
    %12 = vector.shape_cast %11 : vector<1x1x16xf32> to vector<1x16xf32>
    %c0_12 = arith.constant 0 : index
    %c16 = arith.constant 16 : index
    %13 = vector.load %arg16[%c0_12, %c16] : memref<8x64xf32, #tpu.memory_space<vmem>>, vector<1x16xf32>
    tpu.vector_store %arg16[%c0_12, %c16], %12 {strides = array<i32>} : memref<8x64xf32, #tpu.memory_space<vmem>>, vector<1x16xf32>,
    %c0_13 = arith.constant 0 : index
    %14 = memref.load %arg3[%c0_13] : memref<8xi32, #tpu.memory_space<smem>>
    %15 = arith.index_cast %14 : i32 to index
    %c0_14 = arith.constant 0 : index
    %c0_15 = arith.constant 0 : index
    %16 = vector.load %arg8[%15, %c0_14, %c0_15] : memref<7x1x16xf32, #tpu.memory_space<vmem>>, vector<1x1x16xf32>
    %17 = vector.shape_cast %16 : vector<1x1x16xf32> to vector<1x16xf32>
    %c0_16 = arith.constant 0 : index
    %c32 = arith.constant 32 : index
    %18 = vector.load %arg16[%c0_16, %c32] : memref<8x64xf32, #tpu.memory_space<vmem>>, vector<1x16xf32>
    tpu.vector_store %arg16[%c0_16, %c32], %17 {strides = array<i32>} : memref<8x64xf32, #tpu.memory_space<vmem>>, vector<1x16xf32>,
    %c0_17 = arith.constant 0 : index
    %19 = memref.load %arg4[%c0_17] : memref<8xi32, #tpu.memory_space<smem>>
    %20 = arith.index_cast %19 : i32 to index
    %c0_18 = arith.constant 0 : index
    %c0_19 = arith.constant 0 : index
    %21 = vector.load %arg9[%20, %c0_18, %c0_19] : memref<21x1x16xf32, #tpu.memory_space<vmem>>, vector<1x1x16xf32>
    %22 = vector.shape_cast %21 : vector<1x1x16xf32> to vector<1x16xf32>
    %c0_20 = arith.constant 0 : index
    %c48 = arith.constant 48 : index
    %23 = vector.load %arg16[%c0_20, %c48] : memref<8x64xf32, #tpu.memory_space<vmem>>, vector<1x16xf32>
    tpu.vector_store %arg16[%c0_20, %c48], %22 {strides = array<i32>} : memref<8x64xf32, #tpu.memory_space<vmem>>, vector<1x16xf32>,
    %c1 = arith.constant 1 : index
    %24 = memref.load %arg1[%c1] : memref<8xi32, #tpu.memory_space<smem>>
    %25 = arith.index_cast %24 : i32 to index
    %c0_21 = arith.constant 0 : index
    %c0_22 = arith.constant 0 : index
    %26 = vector.load %arg6[%25, %c0_21, %c0_22] : memref<64x1x16xf32, #tpu.memory_space<vmem>>, vector<1x1x16xf32>
    %27 = vector.shape_cast %26 : vector<1x1x16xf32> to vector<1x16xf32>
    %c1_23 = arith.constant 1 : index
    %c0_24 = arith.constant 0 : index
    %28 = vector.load %arg16[%c1_23, %c0_24] : memref<8x64xf32, #tpu.memory_space<vmem>>, vector<1x16xf32>
    tpu.vector_store %arg16[%c1_23, %c0_24], %27 {strides = array<i32>} : memref<8x64xf32, #tpu.memory_space<vmem>>, vector<1x16xf32>,
    %c1_25 = arith.constant 1 : index
    %29 = memref.load %arg2[%c1_25] : memref<8xi32, #tpu.memory_space<smem>>
    %30 = arith.index_cast %29 : i32 to index
    %c0_26 = arith.constant 0 : index
    %c0_27 = arith.constant 0 : index
    %31 = vector.load %arg7[%30, %c0_26, %c0_27] : memref<2x1x16xf32, #tpu.memory_space<vmem>>, vector<1x1x16xf32>
    %32 = vector.shape_cast %31 : vector<1x1x16xf32> to vector<1x16xf32>
    %c1_28 = arith.constant 1 : index
    %c16_29 = arith.constant 16 : index
    %33 = vector.load %arg16[%c1_28, %c16_29] : memref<8x64xf32, #tpu.memory_space<vmem>>, vector<1x16xf32>
    tpu.vector_store %arg16[%c1_28, %c16_29], %32 {strides = array<i32>} : memref<8x64xf32, #tpu.memory_space<vmem>>, vector<1x16xf32>,
    %c1_30 = arith.constant 1 : index
    %34 = memref.load %arg3[%c1_30] : memref<8xi32, #tpu.memory_space<smem>>
    %35 = arith.index_cast %34 : i32 to index
    %c0_31 = arith.constant 0 : index
    %c0_32 = arith.constant 0 : index
    %36 = vector.load %arg8[%35, %c0_31, %c0_32] : memref<7x1x16xf32, #tpu.memory_space<vmem>>, vector<1x1x16xf32>
    %37 = vector.shape_cast %36 : vector<1x1x16xf32> to vector<1x16xf32>
    %c1_33 = arith.constant 1 : index
    %c32_34 = arith.constant 32 : index
    %38 = vector.load %arg16[%c1_33, %c32_34] : memref<8x64xf32, #tpu.memory_space<vmem>>, vector<1x16xf32>
    tpu.vector_store %arg16[%c1_33, %c32_34], %37 {strides = array<i32>} : memref<8x64xf32, #tpu.memory_space<vmem>>, vector<1x16xf32>,
    %c1_35 = arith.constant 1 : index
    %39 = memref.load %arg4[%c1_35] : memref<8xi32, #tpu.memory_space<smem>>
    %40 = arith.index_cast %39 : i32 to index
    %c0_36 = arith.constant 0 : index
    %c0_37 = arith.constant 0 : index
    %41 = vector.load %arg9[%40, %c0_36, %c0_37] : memref<21x1x16xf32, #tpu.memory_space<vmem>>, vector<1x1x16xf32>
    %42 = vector.shape_cast %41 : vector<1x1x16xf32> to vector<1x16xf32>
    %c1_38 = arith.constant 1 : index
    %c48_39 = arith.constant 48 : index
    %43 = vector.load %arg16[%c1_38, %c48_39] : memref<8x64xf32, #tpu.memory_space<vmem>>, vector<1x16xf32>
    tpu.vector_store %arg16[%c1_38, %c48_39], %42 {strides = array<i32>} : memref<8x64xf32, #tpu.memory_space<vmem>>, vector<1x16xf32>,
    %c2 = arith.constant 2 : index
    %44 = memref.load %arg1[%c2] : memref<8xi32, #tpu.memory_space<smem>>
    %45 = arith.index_cast %44 : i32 to index
    %c0_40 = arith.constant 0 : index
    %c0_41 = arith.constant 0 : index
    %46 = vector.load %arg6[%45, %c0_40, %c0_41] : memref<64x1x16xf32, #tpu.memory_space<vmem>>, vector<1x1x16xf32>
    %47 = vector.shape_cast %46 : vector<1x1x16xf32> to vector<1x16xf32>
    %c2_42 = arith.constant 2 : index
    %c0_43 = arith.constant 0 : index
    %48 = vector.load %arg16[%c2_42, %c0_43] : memref<8x64xf32, #tpu.memory_space<vmem>>, vector<1x16xf32>
    tpu.vector_store %arg16[%c2_42, %c0_43], %47 {strides = array<i32>} : memref<8x64xf32, #tpu.memory_space<vmem>>, vector<1x16xf32>,
    %c2_44 = arith.constant 2 : index
    %49 = memref.load %arg2[%c2_44] : memref<8xi32, #tpu.memory_space<smem>>
    %50 = arith.index_cast %49 : i32 to index
    %c0_45 = arith.constant 0 : index
    %c0_46 = arith.constant 0 : index
    %51 = vector.load %arg7[%50, %c0_45, %c0_46] : memref<2x1x16xf32, #tpu.memory_space<vmem>>, vector<1x1x16xf32>
    %52 = vector.shape_cast %51 : vector<1x1x16xf32> to vector<1x16xf32>
    %c2_47 = arith.constant 2 : index
    %c16_48 = arith.constant 16 : index
    %53 = vector.load %arg16[%c2_47, %c16_48] : memref<8x64xf32, #tpu.memory_space<vmem>>, vector<1x16xf32>
    tpu.vector_store %arg16[%c2_47, %c16_48], %52 {strides = array<i32>} : memref<8x64xf32, #tpu.memory_space<vmem>>, vector<1x16xf32>,
    %c2_49 = arith.constant 2 : index
    %54 = memref.load %arg3[%c2_49] : memref<8xi32, #tpu.memory_space<smem>>
    %55 = arith.index_cast %54 : i32 to index
    %c0_50 = arith.constant 0 : index
    %c0_51 = arith.constant 0 : index
    %56 = vector.load %arg8[%55, %c0_50, %c0_51] : memref<7x1x16xf32, #tpu.memory_space<vmem>>, vector<1x1x16xf32>
    %57 = vector.shape_cast %56 : vector<1x1x16xf32> to vector<1x16xf32>
    %c2_52 = arith.constant 2 : index
    %c32_53 = arith.constant 32 : index
    %58 = vector.load %arg16[%c2_52, %c32_53] : memref<8x64xf32, #tpu.memory_space<vmem>>, vector<1x16xf32>
    tpu.vector_store %arg16[%c2_52, %c32_53], %57 {strides = array<i32>} : memref<8x64xf32, #tpu.memory_space<vmem>>, vector<1x16xf32>,
    %c2_54 = arith.constant 2 : index
    %59 = memref.load %arg4[%c2_54] : memref<8xi32, #tpu.memory_space<smem>>
    %60 = arith.index_cast %59 : i32 to index
    %c0_55 = arith.constant 0 : index
    %c0_56 = arith.constant 0 : index
    %61 = vector.load %arg9[%60, %c0_55, %c0_56] : memref<21x1x16xf32, #tpu.memory_space<vmem>>, vector<1x1x16xf32>
    %62 = vector.shape_cast %61 : vector<1x1x16xf32> to vector<1x16xf32>
    %c2_57 = arith.constant 2 : index
    %c48_58 = arith.constant 48 : index
    %63 = vector.load %arg16[%c2_57, %c48_58] : memref<8x64xf32, #tpu.memory_space<vmem>>, vector<1x16xf32>
    tpu.vector_store %arg16[%c2_57, %c48_58], %62 {strides = array<i32>} : memref<8x64xf32, #tpu.memory_space<vmem>>, vector<1x16xf32>,
    %c3 = arith.constant 3 : index
    %64 = memref.load %arg1[%c3] : memref<8xi32, #tpu.memory_space<smem>>
    %65 = arith.index_cast %64 : i32 to index
    %c0_59 = arith.constant 0 : index
    %c0_60 = arith.constant 0 : index
    %66 = vector.load %arg6[%65, %c0_59, %c0_60] : memref<64x1x16xf32, #tpu.memory_space<vmem>>, vector<1x1x16xf32>
    %67 = vector.shape_cast %66 : vector<1x1x16xf32> to vector<1x16xf32>
    %c3_61 = arith.constant 3 : index
    %c0_62 = arith.constant 0 : index
    %68 = vector.load %arg16[%c3_61, %c0_62] : memref<8x64xf32, #tpu.memory_space<vmem>>, vector<1x16xf32>
    tpu.vector_store %arg16[%c3_61, %c0_62], %67 {strides = array<i32>} : memref<8x64xf32, #tpu.memory_space<vmem>>, vector<1x16xf32>,
    %c3_63 = arith.constant 3 : index
    %69 = memref.load %arg2[%c3_63] : memref<8xi32, #tpu.memory_space<smem>>
    %70 = arith.index_cast %69 : i32 to index
    %c0_64 = arith.constant 0 : index
    %c0_65 = arith.constant 0 : index
    %71 = vector.load %arg7[%70, %c0_64, %c0_65] : memref<2x1x16xf32, #tpu.memory_space<vmem>>, vector<1x1x16xf32>
    %72 = vector.shape_cast %71 : vector<1x1x16xf32> to vector<1x16xf32>
    %c3_66 = arith.constant 3 : index
    %c16_67 = arith.constant 16 : index
    %73 = vector.load %arg16[%c3_66, %c16_67] : memref<8x64xf32, #tpu.memory_space<vmem>>, vector<1x16xf32>
    tpu.vector_store %arg16[%c3_66, %c16_67], %72 {strides = array<i32>} : memref<8x64xf32, #tpu.memory_space<vmem>>, vector<1x16xf32>,
    %c3_68 = arith.constant 3 : index
    %74 = memref.load %arg3[%c3_68] : memref<8xi32, #tpu.memory_space<smem>>
    %75 = arith.index_cast %74 : i32 to index
    %c0_69 = arith.constant 0 : index
    %c0_70 = arith.constant 0 : index
    %76 = vector.load %arg8[%75, %c0_69, %c0_70] : memref<7x1x16xf32, #tpu.memory_space<vmem>>, vector<1x1x16xf32>
    %77 = vector.shape_cast %76 : vector<1x1x16xf32> to vector<1x16xf32>
    %c3_71 = arith.constant 3 : index
    %c32_72 = arith.constant 32 : index
    %78 = vector.load %arg16[%c3_71, %c32_72] : memref<8x64xf32, #tpu.memory_space<vmem>>, vector<1x16xf32>
    tpu.vector_store %arg16[%c3_71, %c32_72], %77 {strides = array<i32>} : memref<8x64xf32, #tpu.memory_space<vmem>>, vector<1x16xf32>,
    %c3_73 = arith.constant 3 : index
    %79 = memref.load %arg4[%c3_73] : memref<8xi32, #tpu.memory_space<smem>>
    %80 = arith.index_cast %79 : i32 to index
    %c0_74 = arith.constant 0 : index
    %c0_75 = arith.constant 0 : index
    %81 = vector.load %arg9[%80, %c0_74, %c0_75] : memref<21x1x16xf32, #tpu.memory_space<vmem>>, vector<1x1x16xf32>
    %82 = vector.shape_cast %81 : vector<1x1x16xf32> to vector<1x16xf32>
    %c3_76 = arith.constant 3 : index
    %c48_77 = arith.constant 48 : index
    %83 = vector.load %arg16[%c3_76, %c48_77] : memref<8x64xf32, #tpu.memory_space<vmem>>, vector<1x16xf32>
    tpu.vector_store %arg16[%c3_76, %c48_77], %82 {strides = array<i32>} : memref<8x64xf32, #tpu.memory_space<vmem>>, vector<1x16xf32>,
    %c4 = arith.constant 4 : index
    %84 = memref.load %arg1[%c4] : memref<8xi32, #tpu.memory_space<smem>>
    %85 = arith.index_cast %84 : i32 to index
    %c0_78 = arith.constant 0 : index
    %c0_79 = arith.constant 0 : index
    %86 = vector.load %arg6[%85, %c0_78, %c0_79] : memref<64x1x16xf32, #tpu.memory_space<vmem>>, vector<1x1x16xf32>
    %87 = vector.shape_cast %86 : vector<1x1x16xf32> to vector<1x16xf32>
    %c4_80 = arith.constant 4 : index
    %c0_81 = arith.constant 0 : index
    %88 = vector.load %arg16[%c4_80, %c0_81] : memref<8x64xf32, #tpu.memory_space<vmem>>, vector<1x16xf32>
    tpu.vector_store %arg16[%c4_80, %c0_81], %87 {strides = array<i32>} : memref<8x64xf32, #tpu.memory_space<vmem>>, vector<1x16xf32>,
    %c4_82 = arith.constant 4 : index
    %89 = memref.load %arg2[%c4_82] : memref<8xi32, #tpu.memory_space<smem>>
    %90 = arith.index_cast %89 : i32 to index
    %c0_83 = arith.constant 0 : index
    %c0_84 = arith.constant 0 : index
    %91 = vector.load %arg7[%90, %c0_83, %c0_84] : memref<2x1x16xf32, #tpu.memory_space<vmem>>, vector<1x1x16xf32>
    %92 = vector.shape_cast %91 : vector<1x1x16xf32> to vector<1x16xf32>
    %c4_85 = arith.constant 4 : index
    %c16_86 = arith.constant 16 : index
    %93 = vector.load %arg16[%c4_85, %c16_86] : memref<8x64xf32, #tpu.memory_space<vmem>>, vector<1x16xf32>
    tpu.vector_store %arg16[%c4_85, %c16_86], %92 {strides = array<i32>} : memref<8x64xf32, #tpu.memory_space<vmem>>, vector<1x16xf32>,
    %c4_87 = arith.constant 4 : index
    %94 = memref.load %arg3[%c4_87] : memref<8xi32, #tpu.memory_space<smem>>
    %95 = arith.index_cast %94 : i32 to index
    %c0_88 = arith.constant 0 : index
    %c0_89 = arith.constant 0 : index
    %96 = vector.load %arg8[%95, %c0_88, %c0_89] : memref<7x1x16xf32, #tpu.memory_space<vmem>>, vector<1x1x16xf32>
    %97 = vector.shape_cast %96 : vector<1x1x16xf32> to vector<1x16xf32>
    %c4_90 = arith.constant 4 : index
    %c32_91 = arith.constant 32 : index
    %98 = vector.load %arg16[%c4_90, %c32_91] : memref<8x64xf32, #tpu.memory_space<vmem>>, vector<1x16xf32>
    tpu.vector_store %arg16[%c4_90, %c32_91], %97 {strides = array<i32>} : memref<8x64xf32, #tpu.memory_space<vmem>>, vector<1x16xf32>,
    %c4_92 = arith.constant 4 : index
    %99 = memref.load %arg4[%c4_92] : memref<8xi32, #tpu.memory_space<smem>>
    %100 = arith.index_cast %99 : i32 to index
    %c0_93 = arith.constant 0 : index
    %c0_94 = arith.constant 0 : index
    %101 = vector.load %arg9[%100, %c0_93, %c0_94] : memref<21x1x16xf32, #tpu.memory_space<vmem>>, vector<1x1x16xf32>
    %102 = vector.shape_cast %101 : vector<1x1x16xf32> to vector<1x16xf32>
    %c4_95 = arith.constant 4 : index
    %c48_96 = arith.constant 48 : index
    %103 = vector.load %arg16[%c4_95, %c48_96] : memref<8x64xf32, #tpu.memory_space<vmem>>, vector<1x16xf32>
    tpu.vector_store %arg16[%c4_95, %c48_96], %102 {strides = array<i32>} : memref<8x64xf32, #tpu.memory_space<vmem>>, vector<1x16xf32>,
    %c5 = arith.constant 5 : index
    %104 = memref.load %arg1[%c5] : memref<8xi32, #tpu.memory_space<smem>>
    %105 = arith.index_cast %104 : i32 to index
    %c0_97 = arith.constant 0 : index
    %c0_98 = arith.constant 0 : index
    %106 = vector.load %arg6[%105, %c0_97, %c0_98] : memref<64x1x16xf32, #tpu.memory_space<vmem>>, vector<1x1x16xf32>
    %107 = vector.shape_cast %106 : vector<1x1x16xf32> to vector<1x16xf32>
    %c5_99 = arith.constant 5 : index
    %c0_100 = arith.constant 0 : index
    %108 = vector.load %arg16[%c5_99, %c0_100] : memref<8x64xf32, #tpu.memory_space<vmem>>, vector<1x16xf32>
    tpu.vector_store %arg16[%c5_99, %c0_100], %107 {strides = array<i32>} : memref<8x64xf32, #tpu.memory_space<vmem>>, vector<1x16xf32>,
    %c5_101 = arith.constant 5 : index
    %109 = memref.load %arg2[%c5_101] : memref<8xi32, #tpu.memory_space<smem>>
    %110 = arith.index_cast %109 : i32 to index
    %c0_102 = arith.constant 0 : index
    %c0_103 = arith.constant 0 : index
    %111 = vector.load %arg7[%110, %c0_102, %c0_103] : memref<2x1x16xf32, #tpu.memory_space<vmem>>, vector<1x1x16xf32>
    %112 = vector.shape_cast %111 : vector<1x1x16xf32> to vector<1x16xf32>
    %c5_104 = arith.constant 5 : index
    %c16_105 = arith.constant 16 : index
    %113 = vector.load %arg16[%c5_104, %c16_105] : memref<8x64xf32, #tpu.memory_space<vmem>>, vector<1x16xf32>
    tpu.vector_store %arg16[%c5_104, %c16_105], %112 {strides = array<i32>} : memref<8x64xf32, #tpu.memory_space<vmem>>, vector<1x16xf32>,
    %c5_106 = arith.constant 5 : index
    %114 = memref.load %arg3[%c5_106] : memref<8xi32, #tpu.memory_space<smem>>
    %115 = arith.index_cast %114 : i32 to index
    %c0_107 = arith.constant 0 : index
    %c0_108 = arith.constant 0 : index
    %116 = vector.load %arg8[%115, %c0_107, %c0_108] : memref<7x1x16xf32, #tpu.memory_space<vmem>>, vector<1x1x16xf32>
    %117 = vector.shape_cast %116 : vector<1x1x16xf32> to vector<1x16xf32>
    %c5_109 = arith.constant 5 : index
    %c32_110 = arith.constant 32 : index
    %118 = vector.load %arg16[%c5_109, %c32_110] : memref<8x64xf32, #tpu.memory_space<vmem>>, vector<1x16xf32>
    tpu.vector_store %arg16[%c5_109, %c32_110], %117 {strides = array<i32>} : memref<8x64xf32, #tpu.memory_space<vmem>>, vector<1x16xf32>,
    %c5_111 = arith.constant 5 : index
    %119 = memref.load %arg4[%c5_111] : memref<8xi32, #tpu.memory_space<smem>>
    %120 = arith.index_cast %119 : i32 to index
    %c0_112 = arith.constant 0 : index
    %c0_113 = arith.constant 0 : index
    %121 = vector.load %arg9[%120, %c0_112, %c0_113] : memref<21x1x16xf32, #tpu.memory_space<vmem>>, vector<1x1x16xf32>
    %122 = vector.shape_cast %121 : vector<1x1x16xf32> to vector<1x16xf32>
    %c5_114 = arith.constant 5 : index
    %c48_115 = arith.constant 48 : index
    %123 = vector.load %arg16[%c5_114, %c48_115] : memref<8x64xf32, #tpu.memory_space<vmem>>, vector<1x16xf32>
    tpu.vector_store %arg16[%c5_114, %c48_115], %122 {strides = array<i32>} : memref<8x64xf32, #tpu.memory_space<vmem>>, vector<1x16xf32>,
    %c6 = arith.constant 6 : index
    %124 = memref.load %arg1[%c6] : memref<8xi32, #tpu.memory_space<smem>>
    %125 = arith.index_cast %124 : i32 to index
    %c0_116 = arith.constant 0 : index
    %c0_117 = arith.constant 0 : index
    %126 = vector.load %arg6[%125, %c0_116, %c0_117] : memref<64x1x16xf32, #tpu.memory_space<vmem>>, vector<1x1x16xf32>
    %127 = vector.shape_cast %126 : vector<1x1x16xf32> to vector<1x16xf32>
    %c6_118 = arith.constant 6 : index
    %c0_119 = arith.constant 0 : index
    %128 = vector.load %arg16[%c6_118, %c0_119] : memref<8x64xf32, #tpu.memory_space<vmem>>, vector<1x16xf32>
    tpu.vector_store %arg16[%c6_118, %c0_119], %127 {strides = array<i32>} : memref<8x64xf32, #tpu.memory_space<vmem>>, vector<1x16xf32>,
    %c6_120 = arith.constant 6 : index
    %129 = memref.load %arg2[%c6_120] : memref<8xi32, #tpu.memory_space<smem>>
    %130 = arith.index_cast %129 : i32 to index
    %c0_121 = arith.constant 0 : index
    %c0_122 = arith.constant 0 : index
    %131 = vector.load %arg7[%130, %c0_121, %c0_122] : memref<2x1x16xf32, #tpu.memory_space<vmem>>, vector<1x1x16xf32>
    %132 = vector.shape_cast %131 : vector<1x1x16xf32> to vector<1x16xf32>
    %c6_123 = arith.constant 6 : index
    %c16_124 = arith.constant 16 : index
    %133 = vector.load %arg16[%c6_123, %c16_124] : memref<8x64xf32, #tpu.memory_space<vmem>>, vector<1x16xf32>
    tpu.vector_store %arg16[%c6_123, %c16_124], %132 {strides = array<i32>} : memref<8x64xf32, #tpu.memory_space<vmem>>, vector<1x16xf32>,
    %c6_125 = arith.constant 6 : index
    %134 = memref.load %arg3[%c6_125] : memref<8xi32, #tpu.memory_space<smem>>
    %135 = arith.index_cast %134 : i32 to index
    %c0_126 = arith.constant 0 : index
    %c0_127 = arith.constant 0 : index
    %136 = vector.load %arg8[%135, %c0_126, %c0_127] : memref<7x1x16xf32, #tpu.memory_space<vmem>>, vector<1x1x16xf32>
    %137 = vector.shape_cast %136 : vector<1x1x16xf32> to vector<1x16xf32>
    %c6_128 = arith.constant 6 : index
    %c32_129 = arith.constant 32 : index
    %138 = vector.load %arg16[%c6_128, %c32_129] : memref<8x64xf32, #tpu.memory_space<vmem>>, vector<1x16xf32>
    tpu.vector_store %arg16[%c6_128, %c32_129], %137 {strides = array<i32>} : memref<8x64xf32, #tpu.memory_space<vmem>>, vector<1x16xf32>,
    %c6_130 = arith.constant 6 : index
    %139 = memref.load %arg4[%c6_130] : memref<8xi32, #tpu.memory_space<smem>>
    %140 = arith.index_cast %139 : i32 to index
    %c0_131 = arith.constant 0 : index
    %c0_132 = arith.constant 0 : index
    %141 = vector.load %arg9[%140, %c0_131, %c0_132] : memref<21x1x16xf32, #tpu.memory_space<vmem>>, vector<1x1x16xf32>
    %142 = vector.shape_cast %141 : vector<1x1x16xf32> to vector<1x16xf32>
    %c6_133 = arith.constant 6 : index
    %c48_134 = arith.constant 48 : index
    %143 = vector.load %arg16[%c6_133, %c48_134] : memref<8x64xf32, #tpu.memory_space<vmem>>, vector<1x16xf32>
    tpu.vector_store %arg16[%c6_133, %c48_134], %142 {strides = array<i32>} : memref<8x64xf32, #tpu.memory_space<vmem>>, vector<1x16xf32>,
    %c7 = arith.constant 7 : index
    %144 = memref.load %arg1[%c7] : memref<8xi32, #tpu.memory_space<smem>>
    %145 = arith.index_cast %144 : i32 to index
    %c0_135 = arith.constant 0 : index
    %c0_136 = arith.constant 0 : index
    %146 = vector.load %arg6[%145, %c0_135, %c0_136] : memref<64x1x16xf32, #tpu.memory_space<vmem>>, vector<1x1x16xf32>
    %147 = vector.shape_cast %146 : vector<1x1x16xf32> to vector<1x16xf32>
    %c7_137 = arith.constant 7 : index
    %c0_138 = arith.constant 0 : index
    %148 = vector.load %arg16[%c7_137, %c0_138] : memref<8x64xf32, #tpu.memory_space<vmem>>, vector<1x16xf32>
    tpu.vector_store %arg16[%c7_137, %c0_138], %147 {strides = array<i32>} : memref<8x64xf32, #tpu.memory_space<vmem>>, vector<1x16xf32>,
    %c7_139 = arith.constant 7 : index
    %149 = memref.load %arg2[%c7_139] : memref<8xi32, #tpu.memory_space<smem>>
    %150 = arith.index_cast %149 : i32 to index
    %c0_140 = arith.constant 0 : index
    %c0_141 = arith.constant 0 : index
    %151 = vector.load %arg7[%150, %c0_140, %c0_141] : memref<2x1x16xf32, #tpu.memory_space<vmem>>, vector<1x1x16xf32>
    %152 = vector.shape_cast %151 : vector<1x1x16xf32> to vector<1x16xf32>
    %c7_142 = arith.constant 7 : index
    %c16_143 = arith.constant 16 : index
    %153 = vector.load %arg16[%c7_142, %c16_143] : memref<8x64xf32, #tpu.memory_space<vmem>>, vector<1x16xf32>
    tpu.vector_store %arg16[%c7_142, %c16_143], %152 {strides = array<i32>} : memref<8x64xf32, #tpu.memory_space<vmem>>, vector<1x16xf32>,
    %c7_144 = arith.constant 7 : index
    %154 = memref.load %arg3[%c7_144] : memref<8xi32, #tpu.memory_space<smem>>
    %155 = arith.index_cast %154 : i32 to index
    %c0_145 = arith.constant 0 : index
    %c0_146 = arith.constant 0 : index
    %156 = vector.load %arg8[%155, %c0_145, %c0_146] : memref<7x1x16xf32, #tpu.memory_space<vmem>>, vector<1x1x16xf32>
    %157 = vector.shape_cast %156 : vector<1x1x16xf32> to vector<1x16xf32>
    %c7_147 = arith.constant 7 : index
    %c32_148 = arith.constant 32 : index
    %158 = vector.load %arg16[%c7_147, %c32_148] : memref<8x64xf32, #tpu.memory_space<vmem>>, vector<1x16xf32>
    tpu.vector_store %arg16[%c7_147, %c32_148], %157 {strides = array<i32>} : memref<8x64xf32, #tpu.memory_space<vmem>>, vector<1x16xf32>,
    %c7_149 = arith.constant 7 : index
    %159 = memref.load %arg4[%c7_149] : memref<8xi32, #tpu.memory_space<smem>>
    %160 = arith.index_cast %159 : i32 to index
    %c0_150 = arith.constant 0 : index
    %c0_151 = arith.constant 0 : index
    %161 = vector.load %arg9[%160, %c0_150, %c0_151] : memref<21x1x16xf32, #tpu.memory_space<vmem>>, vector<1x1x16xf32>
    %162 = vector.shape_cast %161 : vector<1x1x16xf32> to vector<1x16xf32>
    %c7_152 = arith.constant 7 : index
    %c48_153 = arith.constant 48 : index
    %163 = vector.load %arg16[%c7_152, %c48_153] : memref<8x64xf32, #tpu.memory_space<vmem>>, vector<1x16xf32>
    tpu.vector_store %arg16[%c7_152, %c48_153], %162 {strides = array<i32>} : memref<8x64xf32, #tpu.memory_space<vmem>>, vector<1x16xf32>,
    %c0_154 = arith.constant 0 : index
    %164 = memref.load %arg5[%c0_154] : memref<8xi32, #tpu.memory_space<smem>>
    %165 = arith.index_cast %164 : i32 to index
    %c0_155 = arith.constant 0 : index
    %c0_156 = arith.constant 0 : index
    %166 = vector.load %arg10[%165, %c0_155, %c0_156] : memref<64x1x16xf32, #tpu.memory_space<vmem>>, vector<1x1x16xf32>
    %167 = vector.shape_cast %166 : vector<1x1x16xf32> to vector<1x16xf32>
    %c0_157 = arith.constant 0 : index
    %c0_158 = arith.constant 0 : index
    %168 = vector.load %arg17[%c0_157, %c0_158] : memref<128x32xf32, #tpu.memory_space<vmem>>, vector<1x16xf32>
    tpu.vector_store %arg17[%c0_157, %c0_158], %167 {strides = array<i32>} : memref<128x32xf32, #tpu.memory_space<vmem>>, vector<1x16xf32>,
    %c1_159 = arith.constant 1 : index
    %169 = memref.load %arg5[%c1_159] : memref<8xi32, #tpu.memory_space<smem>>
    %170 = arith.index_cast %169 : i32 to index
    %c0_160 = arith.constant 0 : index
    %c0_161 = arith.constant 0 : index
    %171 = vector.load %arg10[%170, %c0_160, %c0_161] : memref<64x1x16xf32, #tpu.memory_space<vmem>>, vector<1x1x16xf32>
    %172 = vector.shape_cast %171 : vector<1x1x16xf32> to vector<1x16xf32>
    %c1_162 = arith.constant 1 : index
    %c0_163 = arith.constant 0 : index
    %173 = vector.load %arg17[%c1_162, %c0_163] : memref<128x32xf32, #tpu.memory_space<vmem>>, vector<1x16xf32>
    tpu.vector_store %arg17[%c1_162, %c0_163], %172 {strides = array<i32>} : memref<128x32xf32, #tpu.memory_space<vmem>>, vector<1x16xf32>,
    %c2_164 = arith.constant 2 : index
    %174 = memref.load %arg5[%c2_164] : memref<8xi32, #tpu.memory_space<smem>>
    %175 = arith.index_cast %174 : i32 to index
    %c0_165 = arith.constant 0 : index
    %c0_166 = arith.constant 0 : index
    %176 = vector.load %arg10[%175, %c0_165, %c0_166] : memref<64x1x16xf32, #tpu.memory_space<vmem>>, vector<1x1x16xf32>
    %177 = vector.shape_cast %176 : vector<1x1x16xf32> to vector<1x16xf32>
    %c2_167 = arith.constant 2 : index
    %c0_168 = arith.constant 0 : index
    %178 = vector.load %arg17[%c2_167, %c0_168] : memref<128x32xf32, #tpu.memory_space<vmem>>, vector<1x16xf32>
    tpu.vector_store %arg17[%c2_167, %c0_168], %177 {strides = array<i32>} : memref<128x32xf32, #tpu.memory_space<vmem>>, vector<1x16xf32>,
    %c3_169 = arith.constant 3 : index
    %179 = memref.load %arg5[%c3_169] : memref<8xi32, #tpu.memory_space<smem>>
    %180 = arith.index_cast %179 : i32 to index
    %c0_170 = arith.constant 0 : index
    %c0_171 = arith.constant 0 : index
    %181 = vector.load %arg10[%180, %c0_170, %c0_171] : memref<64x1x16xf32, #tpu.memory_space<vmem>>, vector<1x1x16xf32>
    %182 = vector.shape_cast %181 : vector<1x1x16xf32> to vector<1x16xf32>
    %c3_172 = arith.constant 3 : index
    %c0_173 = arith.constant 0 : index
    %183 = vector.load %arg17[%c3_172, %c0_173] : memref<128x32xf32, #tpu.memory_space<vmem>>, vector<1x16xf32>
    tpu.vector_store %arg17[%c3_172, %c0_173], %182 {strides = array<i32>} : memref<128x32xf32, #tpu.memory_space<vmem>>, vector<1x16xf32>,
    %c4_174 = arith.constant 4 : index
    %184 = memref.load %arg5[%c4_174] : memref<8xi32, #tpu.memory_space<smem>>
    %185 = arith.index_cast %184 : i32 to index
    %c0_175 = arith.constant 0 : index
    %c0_176 = arith.constant 0 : index
    %186 = vector.load %arg10[%185, %c0_175, %c0_176] : memref<64x1x16xf32, #tpu.memory_space<vmem>>, vector<1x1x16xf32>
    %187 = vector.shape_cast %186 : vector<1x1x16xf32> to vector<1x16xf32>
    %c4_177 = arith.constant 4 : index
    %c0_178 = arith.constant 0 : index
    %188 = vector.load %arg17[%c4_177, %c0_178] : memref<128x32xf32, #tpu.memory_space<vmem>>, vector<1x16xf32>
    tpu.vector_store %arg17[%c4_177, %c0_178], %187 {strides = array<i32>} : memref<128x32xf32, #tpu.memory_space<vmem>>, vector<1x16xf32>,
    %c5_179 = arith.constant 5 : index
    %189 = memref.load %arg5[%c5_179] : memref<8xi32, #tpu.memory_space<smem>>
    %190 = arith.index_cast %189 : i32 to index
    %c0_180 = arith.constant 0 : index
    %c0_181 = arith.constant 0 : index
    %191 = vector.load %arg10[%190, %c0_180, %c0_181] : memref<64x1x16xf32, #tpu.memory_space<vmem>>, vector<1x1x16xf32>
    %192 = vector.shape_cast %191 : vector<1x1x16xf32> to vector<1x16xf32>
    %c5_182 = arith.constant 5 : index
    %c0_183 = arith.constant 0 : index
    %193 = vector.load %arg17[%c5_182, %c0_183] : memref<128x32xf32, #tpu.memory_space<vmem>>, vector<1x16xf32>
    tpu.vector_store %arg17[%c5_182, %c0_183], %192 {strides = array<i32>} : memref<128x32xf32, #tpu.memory_space<vmem>>, vector<1x16xf32>,
    %c6_184 = arith.constant 6 : index
    %194 = memref.load %arg5[%c6_184] : memref<8xi32, #tpu.memory_space<smem>>
    %195 = arith.index_cast %194 : i32 to index
    %c0_185 = arith.constant 0 : index
    %c0_186 = arith.constant 0 : index
    %196 = vector.load %arg10[%195, %c0_185, %c0_186] : memref<64x1x16xf32, #tpu.memory_space<vmem>>, vector<1x1x16xf32>
    %197 = vector.shape_cast %196 : vector<1x1x16xf32> to vector<1x16xf32>
    %c6_187 = arith.constant 6 : index
    %c0_188 = arith.constant 0 : index
    %198 = vector.load %arg17[%c6_187, %c0_188] : memref<128x32xf32, #tpu.memory_space<vmem>>, vector<1x16xf32>
    tpu.vector_store %arg17[%c6_187, %c0_188], %197 {strides = array<i32>} : memref<128x32xf32, #tpu.memory_space<vmem>>, vector<1x16xf32>,
    %c7_189 = arith.constant 7 : index
    %199 = memref.load %arg5[%c7_189] : memref<8xi32, #tpu.memory_space<smem>>
    %200 = arith.index_cast %199 : i32 to index
    %c0_190 = arith.constant 0 : index
    %c0_191 = arith.constant 0 : index
    %201 = vector.load %arg10[%200, %c0_190, %c0_191] : memref<64x1x16xf32, #tpu.memory_space<vmem>>, vector<1x1x16xf32>
    %202 = vector.shape_cast %201 : vector<1x1x16xf32> to vector<1x16xf32>
    %c7_192 = arith.constant 7 : index
    %c0_193 = arith.constant 0 : index
    %203 = vector.load %arg17[%c7_192, %c0_193] : memref<128x32xf32, #tpu.memory_space<vmem>>, vector<1x16xf32>
    tpu.vector_store %arg17[%c7_192, %c0_193], %202 {strides = array<i32>} : memref<128x32xf32, #tpu.memory_space<vmem>>, vector<1x16xf32>,
    %c0_194 = arith.constant 0 : index
    %c0_195 = arith.constant 0 : index
    %204 = vector.load %arg12[%c0_194, %c0_195] : memref<8x18xf32, #tpu.memory_space<vmem>>, vector<8x18xf32>
    %c0_196 = arith.constant 0 : index
    %c0_197 = arith.constant 0 : index
    %205 = vector.load %arg11[%c0_196, %c0_197] : memref<18x16xf32, #tpu.memory_space<vmem>>, vector<18x16xf32>
    %cst_198 = arith.constant dense<0.000000e+00> : vector<8x16xf32>
    %206 = tpu.matmul %204, %205, %cst_198 {dimension_numbers = #tpu.dot_dimension_numbers<[1], [0], [0], [1], [0, 0, 1, 1], [], []>, precision = #tpu.contract_precision<fp32>} : vector<8x18xf32>, vector<18x16xf32>, vector<8x16xf32> -> vector<8x16xf32>
    %c0_199 = arith.constant 0 : index
    %c16_200 = arith.constant 16 : index
    %207 = vector.load %arg17[%c0_199, %c16_200] : memref<128x32xf32, #tpu.memory_space<vmem>>, vector<8x16xf32>
    tpu.vector_store %arg17[%c0_199, %c16_200], %206 {strides = array<i32>} : memref<128x32xf32, #tpu.memory_space<vmem>>, vector<8x16xf32>,
    %c0_201 = arith.constant 0 : index
    %c0_202 = arith.constant 0 : index
    %208 = vector.load %arg16[%c0_201, %c0_202] : memref<8x64xf32, #tpu.memory_space<vmem>>, vector<8x64xf32>
    %c0_203 = arith.constant 0 : index
    %c0_204 = arith.constant 0 : index
    %209 = vector.load %arg13[%c0_203, %c0_204] : memref<64x32xf32, #tpu.memory_space<vmem>>, vector<64x32xf32>
    %cst_205 = arith.constant dense<0.000000e+00> : vector<8x32xf32>
    %210 = tpu.matmul %208, %209, %cst_205 {dimension_numbers = #tpu.dot_dimension_numbers<[1], [0], [0], [1], [0, 0, 1, 1], [], []>, precision = #tpu.contract_precision<fp32>} : vector<8x64xf32>, vector<64x32xf32>, vector<8x32xf32> -> vector<8x32xf32>
    %211 = math.tanh %210 : vector<8x32xf32>
    %c0_206 = arith.constant 0 : index
    %c0_207 = arith.constant 0 : index
    %212 = vector.load %arg17[%c0_206, %c0_207] : memref<128x32xf32, #tpu.memory_space<vmem>>, vector<128x32xf32>
    %c0_208 = arith.constant 0 : index
    %c0_209 = arith.constant 0 : index
    %213 = vector.load %arg14[%c0_208, %c0_209] : memref<32x32xf32, #tpu.memory_space<vmem>>, vector<32x32xf32>
    %cst_210 = arith.constant dense<0.000000e+00> : vector<128x32xf32>
    %214 = tpu.matmul %212, %213, %cst_210 {dimension_numbers = #tpu.dot_dimension_numbers<[1], [0], [0], [1], [0, 0, 1, 1], [], []>, precision = #tpu.contract_precision<fp32>} : vector<128x32xf32>, vector<32x32xf32>, vector<128x32xf32> -> vector<128x32xf32>
    %215 = math.tanh %214 : vector<128x32xf32>
    %216 = math.exp %211 : vector<8x32xf32>
    %217 = math.exp %215 : vector<128x32xf32>
    %cst_211 = arith.constant dense<0.000000e+00> : vector<8xf32>
    %218 = vector.multi_reduction <add>, %216, %cst_211 [1] : vector<8x32xf32> to vector<8xf32>
    %219 = vector.shape_cast %218 : vector<8xf32> to vector<8x1xf32>
    %cst_212 = arith.constant 204.081635 : f32
    %220 = vector.broadcast %cst_212 : f32 to vector<8x1xf32>
    %221 = arith.divf %220, %219 : vector<8x1xf32>
    %222 = vector.broadcast %221 : vector<8x1xf32> to vector<8x32xf32>
    %223 = arith.mulf %216, %222 : vector<8x32xf32>
    %cst_213 = arith.constant dense<0.000000e+00> : vector<128xf32>
    %224 = vector.multi_reduction <add>, %217, %cst_213 [1] : vector<128x32xf32> to vector<128xf32>
    %225 = vector.shape_cast %224 : vector<128xf32> to vector<128x1xf32>
    %226 = vector.broadcast %225 : vector<128x1xf32> to vector<128x32xf32>
    %227 = arith.divf %217, %226 : vector<128x32xf32>
    %cst_214 = arith.constant dense<0.000000e+00> : vector<8x128xf32>
    %228 = tpu.matmul %223, %227, %cst_214 {dimension_numbers = #tpu.dot_dimension_numbers<[1], [1], [0], [0], [0, 0, 1, 0], [], []>, precision = #tpu.contract_precision<fp32>} : vector<8x32xf32>, vector<128x32xf32>, vector<8x128xf32> -> vector<8x128xf32>
    %229 = tpu.iota {dimensions = array<i32: 1>} : vector<8x128xi32>
    %c8_i32 = arith.constant 8 : i32
    %230 = vector.broadcast %c8_i32 : i32 to vector<8x128xi32>
    %231 = arith.cmpi slt, %229, %230 : vector<8x128xi32>
    %cst_215 = arith.constant -1.000000e+30 : f32
    %232 = vector.broadcast %cst_215 : f32 to vector<8x128xf32>
    %233 = arith.select %231, %228, %232 : vector<8x128xi1>, vector<8x128xf32>
    %cst_216 = arith.constant dense<0xFF800000> : vector<8xf32>
    %234 = vector.multi_reduction <maximumf>, %233, %cst_216 [1] : vector<8x128xf32> to vector<8xf32>
    %235 = vector.shape_cast %234 : vector<8xf32> to vector<8x1xf32>
    %236 = vector.broadcast %235 : vector<8x1xf32> to vector<8x128xf32>
    %237 = arith.subf %233, %236 : vector<8x128xf32>
    %238 = math.exp %237 : vector<8x128xf32>
    %cst_217 = arith.constant dense<0.000000e+00> : vector<8xf32>
    %239 = vector.multi_reduction <add>, %238, %cst_217 [1] : vector<8x128xf32> to vector<8xf32>
    %240 = vector.shape_cast %239 : vector<8xf32> to vector<8x1xf32>
    %241 = tpu.reciprocal %240 {approx = true} : vector<8x1xf32> -> vector<8x1xf32>
    %242 = vector.broadcast %241 : vector<8x1xf32> to vector<8x128xf32>
    %243 = arith.mulf %238, %242 : vector<8x128xf32>
    %c0_218 = arith.constant 0 : index
    %c0_219 = arith.constant 0 : index
    %244 = vector.load %arg15[%c0_218, %c0_219] : memref<8x128xf32, #tpu.memory_space<vmem>>, vector<8x128xf32>
    tpu.vector_store %arg15[%c0_218, %c0_219], %243 {strides = array<i32>} : memref<8x128xf32, #tpu.memory_space<vmem>>, vector<8x128xf32>,
    return
  }
  func.func @transform_0(%arg0: i32, %arg1: memref<8xi32, #tpu.memory_space<smem>>, %arg2: memref<8xi32, #tpu.memory_space<smem>>, %arg3: memref<8xi32, #tpu.memory_space<smem>>, %arg4: memref<8xi32, #tpu.memory_space<smem>>, %arg5: memref<8xi32, #tpu.memory_space<smem>>) -> (i32, i32, i32) {
    %c0_i32 = arith.constant 0 : i32
    %c0_i32_0 = arith.constant 0 : i32
    %c0_i32_1 = arith.constant 0 : i32
    %c0_i32_2 = arith.constant 0 : i32
    return %c0_i32, %c0_i32_0, %c0_i32_1 : i32, i32, i32
  }
  func.func @transform_1(%arg0: i32, %arg1: memref<8xi32, #tpu.memory_space<smem>>, %arg2: memref<8xi32, #tpu.memory_space<smem>>, %arg3: memref<8xi32, #tpu.memory_space<smem>>, %arg4: memref<8xi32, #tpu.memory_space<smem>>, %arg5: memref<8xi32, #tpu.memory_space<smem>>) -> (i32, i32, i32) {
    %c0_i32 = arith.constant 0 : i32
    %c0_i32_0 = arith.constant 0 : i32
    %c0_i32_1 = arith.constant 0 : i32
    %c0_i32_2 = arith.constant 0 : i32
    return %c0_i32, %c0_i32_0, %c0_i32_1 : i32, i32, i32
  }
  func.func @transform_2(%arg0: i32, %arg1: memref<8xi32, #tpu.memory_space<smem>>, %arg2: memref<8xi32, #tpu.memory_space<smem>>, %arg3: memref<8xi32, #tpu.memory_space<smem>>, %arg4: memref<8xi32, #tpu.memory_space<smem>>, %arg5: memref<8xi32, #tpu.memory_space<smem>>) -> (i32, i32, i32) {
    %c0_i32 = arith.constant 0 : i32
    %c0_i32_0 = arith.constant 0 : i32
    %c0_i32_1 = arith.constant 0 : i32
    %c0_i32_2 = arith.constant 0 : i32
    return %c0_i32, %c0_i32_0, %c0_i32_1 : i32, i32, i32
  }
  func.func @transform_3(%arg0: i32, %arg1: memref<8xi32, #tpu.memory_space<smem>>, %arg2: memref<8xi32, #tpu.memory_space<smem>>, %arg3: memref<8xi32, #tpu.memory_space<smem>>, %arg4: memref<8xi32, #tpu.memory_space<smem>>, %arg5: memref<8xi32, #tpu.memory_space<smem>>) -> (i32, i32, i32) {
    %c0_i32 = arith.constant 0 : i32
    %c0_i32_0 = arith.constant 0 : i32
    %c0_i32_1 = arith.constant 0 : i32
    %c0_i32_2 = arith.constant 0 : i32
    return %c0_i32, %c0_i32_0, %c0_i32_1 : i32, i32, i32
  }
  func.func @transform_4(%arg0: i32, %arg1: memref<8xi32, #tpu.memory_space<smem>>, %arg2: memref<8xi32, #tpu.memory_space<smem>>, %arg3: memref<8xi32, #tpu.memory_space<smem>>, %arg4: memref<8xi32, #tpu.memory_space<smem>>, %arg5: memref<8xi32, #tpu.memory_space<smem>>) -> (i32, i32, i32) {
    %c0_i32 = arith.constant 0 : i32
    %c0_i32_0 = arith.constant 0 : i32
    %c0_i32_1 = arith.constant 0 : i32
    %c0_i32_2 = arith.constant 0 : i32
    return %c0_i32, %c0_i32_0, %c0_i32_1 : i32, i32, i32
  }
  func.func @transform_5(%arg0: i32, %arg1: memref<8xi32, #tpu.memory_space<smem>>, %arg2: memref<8xi32, #tpu.memory_space<smem>>, %arg3: memref<8xi32, #tpu.memory_space<smem>>, %arg4: memref<8xi32, #tpu.memory_space<smem>>, %arg5: memref<8xi32, #tpu.memory_space<smem>>) -> (i32, i32) {
    %c0_i32 = arith.constant 0 : i32
    %c0_i32_0 = arith.constant 0 : i32
    %c0_i32_1 = arith.constant 0 : i32
    return %c0_i32, %c0_i32_0 : i32, i32
  }
  func.func @transform_6(%arg0: i32, %arg1: memref<8xi32, #tpu.memory_space<smem>>, %arg2: memref<8xi32, #tpu.memory_space<smem>>, %arg3: memref<8xi32, #tpu.memory_space<smem>>, %arg4: memref<8xi32, #tpu.memory_space<smem>>, %arg5: memref<8xi32, #tpu.memory_space<smem>>) -> (i32, i32) {
    %c0_i32 = arith.constant 0 : i32
    %c0_i32_0 = arith.constant 0 : i32
    %c0_i32_1 = arith.constant 0 : i32
    return %c0_i32, %c0_i32_0 : i32, i32
  }
  func.func @transform_7(%arg0: i32, %arg1: memref<8xi32, #tpu.memory_space<smem>>, %arg2: memref<8xi32, #tpu.memory_space<smem>>, %arg3: memref<8xi32, #tpu.memory_space<smem>>, %arg4: memref<8xi32, #tpu.memory_space<smem>>, %arg5: memref<8xi32, #tpu.memory_space<smem>>) -> (i32, i32) {
    %c0_i32 = arith.constant 0 : i32
    %c0_i32_0 = arith.constant 0 : i32
    %c0_i32_1 = arith.constant 0 : i32
    return %c0_i32, %c0_i32_0 : i32, i32
  }
  func.func @transform_8(%arg0: i32, %arg1: memref<8xi32, #tpu.memory_space<smem>>, %arg2: memref<8xi32, #tpu.memory_space<smem>>, %arg3: memref<8xi32, #tpu.memory_space<smem>>, %arg4: memref<8xi32, #tpu.memory_space<smem>>, %arg5: memref<8xi32, #tpu.memory_space<smem>>) -> (i32, i32) {
    %c0_i32 = arith.constant 0 : i32
    %c0_i32_0 = arith.constant 0 : i32
    %c0_i32_1 = arith.constant 0 : i32
    return %c0_i32, %c0_i32_0 : i32, i32
  }
  func.func @transform_9(%arg0: i32, %arg1: memref<8xi32, #tpu.memory_space<smem>>, %arg2: memref<8xi32, #tpu.memory_space<smem>>, %arg3: memref<8xi32, #tpu.memory_space<smem>>, %arg4: memref<8xi32, #tpu.memory_space<smem>>, %arg5: memref<8xi32, #tpu.memory_space<smem>>) -> (i32, i32) {
    %c0_i32 = arith.constant 0 : i32
    %c0_i32_0 = arith.constant 0 : i32
    %c0_i32_1 = arith.constant 0 : i32
    return %c0_i32, %c0_i32_0 : i32, i32
  }
}

</mosaic_0001>

<llo_original>
// kernel: tpu_custom_call.1
$region0: #{tpu_custom_call.1}
  #allocation0 [shape = 'u32[]', space=smem, size = 0x4, offset = 0x4, fixed_abs, tag = 'smem constant byte address 0x4 - core index']
  #allocation1 [shape = 'u32[72,128]{1,0:T(1,128)}', space=vmem, size = 0x9000, scoped, tag = 'internal scratch']
  #allocation2 [shape = 'f32[8,64]{1,0:T(8,128)}', space=vmem, size = 0x1000, scoped, tag = 'scratch operand']
  #allocation3 [shape = 'f32[128,32]{1,0:T(8,128)}', space=vmem, size = 0x10000, scoped, tag = 'scratch operand']
  #allocation4 [shape = 's32[1]{0}', space=sflag, size = 0x4, scoped, tag = 'scoped memory for tpu_custom_call.1']
  #allocation5 [shape = 'u8[512]{0}', space=smem, size = 0x200, scoped, tag = 'prefetched SMEM operand 0']
  #allocation6 [shape = 'u8[512]{0}', space=smem, size = 0x200, scoped, tag = 'prefetched SMEM operand 1']
  #allocation7 [shape = 'u8[512]{0}', space=smem, size = 0x200, scoped, tag = 'prefetched SMEM operand 2']
  #allocation8 [shape = 'u8[512]{0}', space=smem, size = 0x200, scoped, tag = 'prefetched SMEM operand 3']
  #allocation9 [shape = 'u8[512]{0}', space=smem, size = 0x200, scoped, tag = 'prefetched SMEM operand 4']
  %s0 = inlined_call_operand.vmem [shape: s32[8], index: 0, kind: input, shape index: {}]
  %s1 = inlined_call_operand.vmem [shape: s32[8], index: 1, kind: input, shape index: {}]
  %s2 = inlined_call_operand.vmem [shape: s32[8], index: 2, kind: input, shape index: {}]
  %s3 = inlined_call_operand.vmem [shape: s32[8], index: 3, kind: input, shape index: {}]
  %s4 = inlined_call_operand.vmem [shape: s32[8], index: 4, kind: input, shape index: {}]
  %s5 = inlined_call_operand.vmem [shape: f32[64,1,16], index: 5, kind: input, shape index: {}]
  %s6 = inlined_call_operand.vmem [shape: f32[2,1,16], index: 6, kind: input, shape index: {}]
  %s7 = inlined_call_operand.vmem [shape: f32[7,1,16], index: 7, kind: input, shape index: {}]
  %s8 = inlined_call_operand.vmem [shape: f32[21,1,16], index: 8, kind: input, shape index: {}]
  %s9 = inlined_call_operand.vmem [shape: f32[64,1,16], index: 9, kind: input, shape index: {}]
  %s10 = inlined_call_operand.vmem [shape: f32[18,16], index: 10, kind: input, shape index: {}]
  %s11 = inlined_call_operand.vmem [shape: f32[8,18], index: 11, kind: input, shape index: {}]
  %s12 = inlined_call_operand.vmem [shape: f32[64,32], index: 12, kind: input, shape index: {}]
  %s13 = inlined_call_operand.vmem [shape: f32[32,32], index: 13, kind: input, shape index: {}]
  %s14 = inlined_call_operand.hbm [shape: f32[8,128], index: 14, kind: output, shape index: {}]
  %s15 = sld [smem:[#allocation0]]
  $region46: #{tpu_custom_call.1} parent=0
    _
  %s17 = ssub.s32 1, %s15
  %s18 = scalar_select 0, %s17, %s15
  %s20 = sshll.u32 %s0, 4
  %s21 = int_to_ptr.vmem [resolvable:$true] %s20
  %23 = dma.vmem_to_smem %s21, 16, [#allocation5], [#allocation4]
  %s25 = sshll.u32 %s1, 4
  %s26 = int_to_ptr.vmem [resolvable:$true] %s25
  %28 = dma.vmem_to_smem %s26, 16, [#allocation6], [#allocation4]
  %s30 = sshll.u32 %s2, 4
  %s31 = int_to_ptr.vmem [resolvable:$true] %s30
  %33 = dma.vmem_to_smem %s31, 16, [#allocation7], [#allocation4]
  %s35 = sshll.u32 %s3, 4
  %s36 = int_to_ptr.vmem [resolvable:$true] %s35
  %38 = dma.vmem_to_smem %s36, 16, [#allocation8], [#allocation4]
  %s40 = sshll.u32 %s4, 4
  %s41 = int_to_ptr.vmem [resolvable:$true] %s40
  %43 = dma.vmem_to_smem %s41, 16, [#allocation9], [#allocation4]
  %45 = dma.done [#allocation4], 80
  %46 = sfence
  $region1: #{tpu_custom_call.1} parent=0
    #allocation10 [shape = 'u8[4096]{0}', space=vmem, size = 0x1000, scoped, tag = 'output window, operand 0, single buffered']
    #allocation11 [shape = 's32[1]{0}', space=sflag, size = 0x4, scoped, tag = 'scoped memory for tpu_custom_call.1']
    %47 = vsyncpa [#allocation11], 0
    // Predicated region
    $region2: #{tpu_custom_call.1} parent=1 // pred_check
      _
    $region3: #{tpu_custom_call.1} parent=1 // pred_check_branch
      %49 = sbr.rel (0) target = $region5
    $region4: #{tpu_custom_call.1} parent=1 // pred_region
      _
    $region5: #{tpu_custom_call.1} parent=1 // pred_fallthru
      _
    // Predicated region
    $region6: #{tpu_custom_call.1} parent=1 // pred_check
      _
    $region7: #{tpu_custom_call.1} parent=1 // pred_check_branch
      %51 = sbr.rel (0) target = $region9
    $region8: #{tpu_custom_call.1} parent=1 // pred_region
      _
    $region9: #{tpu_custom_call.1} parent=1 // pred_fallthru
      _
    // Predicated region
    $region10: #{tpu_custom_call.1} parent=1 // pred_check
      _
    $region11: #{tpu_custom_call.1} parent=1 // pred_check_branch
      %53 = sbr.rel (0) target = $region13
    $region12: #{tpu_custom_call.1} parent=1 // pred_region
      _
    $region13: #{tpu_custom_call.1} parent=1 // pred_fallthru
      _
    // Predicated region
    $region14: #{tpu_custom_call.1} parent=1 // pred_check
      _
    $region15: #{tpu_custom_call.1} parent=1 // pred_check_branch
      %55 = sbr.rel (0) target = $region17
    $region16: #{tpu_custom_call.1} parent=1 // pred_region
      _
    $region17: #{tpu_custom_call.1} parent=1 // pred_fallthru
      _
    // Predicated region
    $region18: #{tpu_custom_call.1} parent=1 // pred_check
      _
    $region19: #{tpu_custom_call.1} parent=1 // pred_check_branch
      %57 = sbr.rel (0) target = $region21
    $region20: #{tpu_custom_call.1} parent=1 // pred_region
      _
    $region21: #{tpu_custom_call.1} parent=1 // pred_fallthru
      _
    // Predicated region
    $region22: #{tpu_custom_call.1} parent=1 // pred_check
      _
    $region23: #{tpu_custom_call.1} parent=1 // pred_check_branch
      %59 = sbr.rel (0) target = $region25
    $region24: #{tpu_custom_call.1} parent=1 // pred_region
      _
    $region25: #{tpu_custom_call.1} parent=1 // pred_fallthru
      _
    // Predicated region
    $region26: #{tpu_custom_call.1} parent=1 // pred_check
      _
    $region27: #{tpu_custom_call.1} parent=1 // pred_check_branch
      %61 = sbr.rel (0) target = $region29
    $region28: #{tpu_custom_call.1} parent=1 // pred_region
      _
    $region29: #{tpu_custom_call.1} parent=1 // pred_fallthru
      _
    // Predicated region
    $region30: #{tpu_custom_call.1} parent=1 // pred_check
      _
    $region31: #{tpu_custom_call.1} parent=1 // pred_check_branch
      %63 = sbr.rel (0) target = $region33
    $region32: #{tpu_custom_call.1} parent=1 // pred_region
      _
    $region33: #{tpu_custom_call.1} parent=1 // pred_fallthru
      _
    // Predicated region
    $region34: #{tpu_custom_call.1} parent=1 // pred_check
      _
    $region35: #{tpu_custom_call.1} parent=1 // pred_check_branch
      %65 = sbr.rel (0) target = $region37
    $region36: #{tpu_custom_call.1} parent=1 // pred_region
      _
    $region37: #{tpu_custom_call.1} parent=1 // pred_fallthru
      _
    %vm66 = vcmask 523264
    %67 = vst.msk [vmem:[#allocation2] sm:$0xff] %vm66, 0.0
    %vm68 = vcmask 261120
    %69 = vst.msk [vmem:[#allocation3] sm:$0xff] %vm68, 0.0
    %70 = vst.msk [vmem:[#allocation3 + $0x8] sm:$0xff] %vm68, 0.0
    %71 = vst.msk [vmem:[#allocation3 + $0x10] sm:$0xff] %vm68, 0.0
    %72 = vst.msk [vmem:[#allocation3 + $0x18] sm:$0xff] %vm68, 0.0
    %73 = vst.msk [vmem:[#allocation3 + $0x20] sm:$0xff] %vm68, 0.0
    %74 = vst.msk [vmem:[#allocation3 + $0x28] sm:$0xff] %vm68, 0.0
    %75 = vst.msk [vmem:[#allocation3 + $0x30] sm:$0xff] %vm68, 0.0
    %76 = vst.msk [vmem:[#allocation3 + $0x38] sm:$0xff] %vm68, 0.0
    %77 = vst.msk [vmem:[#allocation3 + $0x40] sm:$0xff] %vm68, 0.0
    %78 = vst.msk [vmem:[#allocation3 + $0x48] sm:$0xff] %vm68, 0.0
    %79 = vst.msk [vmem:[#allocation3 + $0x50] sm:$0xff] %vm68, 0.0
    %80 = vst.msk [vmem:[#allocation3 + $0x58] sm:$0xff] %vm68, 0.0
    %81 = vst.msk [vmem:[#allocation3 + $0x60] sm:$0xff] %vm68, 0.0
    %82 = vst.msk [vmem:[#allocation3 + $0x68] sm:$0xff] %vm68, 0.0
    %83 = vst.msk [vmem:[#allocation3 + $0x70] sm:$0xff] %vm68, 0.0
    %84 = vst.msk [vmem:[#allocation3 + $0x78] sm:$0xff] %vm68, 0.0
    %s85 = sld [smem:[#allocation5]]
    %s86 = scalar_lea.vmem %s5, %s85
    %v87 = vld [vmem:[%s86] sm:$0x1]
    %vm88 = vcmask 122880
    %89 = vst.msk [vmem:[#allocation2] sm:$0x1] %vm88, %v87
    %s90 = sld [smem:[#allocation6]]
    %s91 = scalar_lea.vmem %s6, %s90
    %v92 = vld [vmem:[%s91] sm:$0x1]
    %v94 = vperm.slane %v92, 0
    %95 = vrot.lane.b32.xlu0 %v94, 16
    %v96 = vpop.permute.xlu0 %95
    %vm98 = vcmask 254080
    %99 = vst.msk [vmem:[#allocation2] sm:$0x1] %vm98, %v96
    %s100 = sld [smem:[#allocation7]]
    %s101 = scalar_lea.vmem %s7, %s100
    %v102 = vld [vmem:[%s101] sm:$0x1]
    %v104 = vperm.slane %v102, 0
    %105 = vrot.lane.b32.xlu0 %v104, 32
    %v106 = vpop.permute.xlu0 %105
    %vm108 = vcmask 385280
    %109 = vst.msk [vmem:[#allocation2] sm:$0x1] %vm108, %v106
    %s110 = sld [smem:[#allocation8]]
    %s111 = scalar_lea.vmem %s8, %s110
    %v112 = vld [vmem:[%s111] sm:$0x1]
    %v114 = vperm.slane %v112, 0
    %115 = vrot.lane.b32.xlu0 %v114, 48
    %v116 = vpop.permute.xlu0 %115
    %vm118 = vcmask 516480
    %119 = vst.msk [vmem:[#allocation2] sm:$0x1] %vm118, %v116
    %s120 = sld [smem:[#allocation5 + $0x1]]
    %s121 = scalar_lea.vmem %s5, %s120
    %v122 = vld [vmem:[%s121] sm:$0x1]
    %123 = vst.msk [vmem:[#allocation2 + $0x1] sm:$0x1] %vm88, %v122
    %s124 = sld [smem:[#allocation6 + $0x1]]
    %s125 = scalar_lea.vmem %s6, %s124
    %v126 = vld [vmem:[%s125] sm:$0x1]
    %v128 = vperm.slane %v126, 0
    %129 = vrot.lane.b32.xlu0 %v128, 16
    %v130 = vpop.permute.xlu0 %129
    %132 = vst.msk [vmem:[#allocation2 + $0x1] sm:$0x1] %vm98, %v130
    %s133 = sld [smem:[#allocation7 + $0x1]]
    %s134 = scalar_lea.vmem %s7, %s133
    %v135 = vld [vmem:[%s134] sm:$0x1]
    %v137 = vperm.slane %v135, 0
    %138 = vrot.lane.b32.xlu0 %v137, 32
    %v139 = vpop.permute.xlu0 %138
    %141 = vst.msk [vmem:[#allocation2 + $0x1] sm:$0x1] %vm108, %v139
    %s142 = sld [smem:[#allocation8 + $0x1]]
    %s143 = scalar_lea.vmem %s8, %s142
    %v144 = vld [vmem:[%s143] sm:$0x1]
    %v146 = vperm.slane %v144, 0
    %147 = vrot.lane.b32.xlu0 %v146, 48
    %v148 = vpop.permute.xlu0 %147
    %150 = vst.msk [vmem:[#allocation2 + $0x1] sm:$0x1] %vm118, %v148
    %s151 = sld [smem:[#allocation5 + $0x2]]
    %s152 = scalar_lea.vmem %s5, %s151
    %v153 = vld [vmem:[%s152] sm:$0x1]
    %154 = vst.msk [vmem:[#allocation2 + $0x2] sm:$0x1] %vm88, %v153
    %s155 = sld [smem:[#allocation6 + $0x2]]
    %s156 = scalar_lea.vmem %s6, %s155
    %v157 = vld [vmem:[%s156] sm:$0x1]
    %v159 = vperm.slane %v157, 0
    %160 = vrot.lane.b32.xlu0 %v159, 16
    %v161 = vpop.permute.xlu0 %160
    %163 = vst.msk [vmem:[#allocation2 + $0x2] sm:$0x1] %vm98, %v161
    %s164 = sld [smem:[#allocation7 + $0x2]]
    %s165 = scalar_lea.vmem %s7, %s164
    %v166 = vld [vmem:[%s165] sm:$0x1]
    %v168 = vperm.slane %v166, 0
    %169 = vrot.lane.b32.xlu0 %v168, 32
    %v170 = vpop.permute.xlu0 %169
    %172 = vst.msk [vmem:[#allocation2 + $0x2] sm:$0x1] %vm108, %v170
    %s173 = sld [smem:[#allocation8 + $0x2]]
    %s174 = scalar_lea.vmem %s8, %s173
    %v175 = vld [vmem:[%s174] sm:$0x1]
    %v177 = vperm.slane %v175, 0
    %178 = vrot.lane.b32.xlu0 %v177, 48
    %v179 = vpop.permute.xlu0 %178
    %181 = vst.msk [vmem:[#allocation2 + $0x2] sm:$0x1] %vm118, %v179
    %s182 = sld [smem:[#allocation5 + $0x3]]
    %s183 = scalar_lea.vmem %s5, %s182
    %v184 = vld [vmem:[%s183] sm:$0x1]
    %185 = vst.msk [vmem:[#allocation2 + $0x3] sm:$0x1] %vm88, %v184
    %s186 = sld [smem:[#allocation6 + $0x3]]
    %s187 = scalar_lea.vmem %s6, %s186
    %v188 = vld [vmem:[%s187] sm:$0x1]
    %v190 = vperm.slane %v188, 0
    %191 = vrot.lane.b32.xlu0 %v190, 16
    %v192 = vpop.permute.xlu0 %191
    %194 = vst.msk [vmem:[#allocation2 + $0x3] sm:$0x1] %vm98, %v192
    %s195 = sld [smem:[#allocation7 + $0x3]]
    %s196 = scalar_lea.vmem %s7, %s195
    %v197 = vld [vmem:[%s196] sm:$0x1]
    %v199 = vperm.slane %v197, 0
    %200 = vrot.lane.b32.xlu0 %v199, 32
    %v201 = vpop.permute.xlu0 %200
    %203 = vst.msk [vmem:[#allocation2 + $0x3] sm:$0x1] %vm108, %v201
    %s204 = sld [smem:[#allocation8 + $0x3]]
    %s205 = scalar_lea.vmem %s8, %s204
    %v206 = vld [vmem:[%s205] sm:$0x1]
    %v208 = vperm.slane %v206, 0
    %209 = vrot.lane.b32.xlu0 %v208, 48
    %v210 = vpop.permute.xlu0 %209
    %212 = vst.msk [vmem:[#allocation2 + $0x3] sm:$0x1] %vm118, %v210
    %s213 = sld [smem:[#allocation5 + $0x4]]
    %s214 = scalar_lea.vmem %s5, %s213
    %v215 = vld [vmem:[%s214] sm:$0x1]
    %216 = vst.msk [vmem:[#allocation2 + $0x4] sm:$0x1] %vm88, %v215
    %s217 = sld [smem:[#allocation6 + $0x4]]
    %s218 = scalar_lea.vmem %s6, %s217
    %v219 = vld [vmem:[%s218] sm:$0x1]
    %v221 = vperm.slane %v219, 0
    %222 = vrot.lane.b32.xlu0 %v221, 16
    %v223 = vpop.permute.xlu0 %222
    %225 = vst.msk [vmem:[#allocation2 + $0x4] sm:$0x1] %vm98, %v223
    %s226 = sld [smem:[#allocation7 + $0x4]]
    %s227 = scalar_lea.vmem %s7, %s226
    %v228 = vld [vmem:[%s227] sm:$0x1]
    %v230 = vperm.slane %v228, 0
    %231 = vrot.lane.b32.xlu0 %v230, 32
    %v232 = vpop.permute.xlu0 %231
    %234 = vst.msk [vmem:[#allocation2 + $0x4] sm:$0x1] %vm108, %v232
    %s235 = sld [smem:[#allocation8 + $0x4]]
    %s236 = scalar_lea.vmem %s8, %s235
    %v237 = vld [vmem:[%s236] sm:$0x1]
    %v239 = vperm.slane %v237, 0
    %240 = vrot.lane.b32.xlu0 %v239, 48
    %v241 = vpop.permute.xlu0 %240
    %243 = vst.msk [vmem:[#allocation2 + $0x4] sm:$0x1] %vm118, %v241
    %s244 = sld [smem:[#allocation5 + $0x5]]
    %s245 = scalar_lea.vmem %s5, %s244
    %v246 = vld [vmem:[%s245] sm:$0x1]
    %247 = vst.msk [vmem:[#allocation2 + $0x5] sm:$0x1] %vm88, %v246
    %s248 = sld [smem:[#allocation6 + $0x5]]
    %s249 = scalar_lea.vmem %s6, %s248
    %v250 = vld [vmem:[%s249] sm:$0x1]
    %v252 = vperm.slane %v250, 0
    %253 = vrot.lane.b32.xlu0 %v252, 16
    %v254 = vpop.permute.xlu0 %253
    %256 = vst.msk [vmem:[#allocation2 + $0x5] sm:$0x1] %vm98, %v254
    %s257 = sld [smem:[#allocation7 + $0x5]]
    %s258 = scalar_lea.vmem %s7, %s257
    %v259 = vld [vmem:[%s258] sm:$0x1]
    %v261 = vperm.slane %v259, 0
    %262 = vrot.lane.b32.xlu0 %v261, 32
    %v263 = vpop.permute.xlu0 %262
    %265 = vst.msk [vmem:[#allocation2 + $0x5] sm:$0x1] %vm108, %v263
    %s266 = sld [smem:[#allocation8 + $0x5]]
    %s267 = scalar_lea.vmem %s8, %s266
    %v268 = vld [vmem:[%s267] sm:$0x1]
    %v270 = vperm.slane %v268, 0
    %271 = vrot.lane.b32.xlu0 %v270, 48
    %v272 = vpop.permute.xlu0 %271
    %274 = vst.msk [vmem:[#allocation2 + $0x5] sm:$0x1] %vm118, %v272
    %s275 = sld [smem:[#allocation5 + $0x6]]
    %s276 = scalar_lea.vmem %s5, %s275
    %v277 = vld [vmem:[%s276] sm:$0x1]
    %278 = vst.msk [vmem:[#allocation2 + $0x6] sm:$0x1] %vm88, %v277
    %s279 = sld [smem:[#allocation6 + $0x6]]
    %s280 = scalar_lea.vmem %s6, %s279
    %v281 = vld [vmem:[%s280] sm:$0x1]
    %v283 = vperm.slane %v281, 0
    %284 = vrot.lane.b32.xlu0 %v283, 16
    %v285 = vpop.permute.xlu0 %284
    %287 = vst.msk [vmem:[#allocation2 + $0x6] sm:$0x1] %vm98, %v285
    %s288 = sld [smem:[#allocation7 + $0x6]]
    %s289 = scalar_lea.vmem %s7, %s288
    %v290 = vld [vmem:[%s289] sm:$0x1]
    %v292 = vperm.slane %v290, 0
    %293 = vrot.lane.b32.xlu0 %v292, 32
    %v294 = vpop.permute.xlu0 %293
    %296 = vst.msk [vmem:[#allocation2 + $0x6] sm:$0x1] %vm108, %v294
    %s297 = sld [smem:[#allocation8 + $0x6]]
    %s298 = scalar_lea.vmem %s8, %s297
    %v299 = vld [vmem:[%s298] sm:$0x1]
    %v301 = vperm.slane %v299, 0
    %302 = vrot.lane.b32.xlu0 %v301, 48
    %v303 = vpop.permute.xlu0 %302
    %305 = vst.msk [vmem:[#allocation2 + $0x6] sm:$0x1] %vm118, %v303
    %s306 = sld [smem:[#allocation5 + $0x7]]
    %s307 = scalar_lea.vmem %s5, %s306
    %v308 = vld [vmem:[%s307] sm:$0x1]
    %309 = vst.msk [vmem:[#allocation2 + $0x7] sm:$0x1] %vm88, %v308
    %s310 = sld [smem:[#allocation6 + $0x7]]
    %s311 = scalar_lea.vmem %s6, %s310
    %v312 = vld [vmem:[%s311] sm:$0x1]
    %v314 = vperm.slane %v312, 0
    %315 = vrot.lane.b32.xlu0 %v314, 16
    %v316 = vpop.permute.xlu0 %315
    %318 = vst.msk [vmem:[#allocation2 + $0x7] sm:$0x1] %vm98, %v316
    %s319 = sld [smem:[#allocation7 + $0x7]]
    %s320 = scalar_lea.vmem %s7, %s319
    %v321 = vld [vmem:[%s320] sm:$0x1]
    %v323 = vperm.slane %v321, 0
    %324 = vrot.lane.b32.xlu0 %v323, 32
    %v325 = vpop.permute.xlu0 %324
    %327 = vst.msk [vmem:[#allocation2 + $0x7] sm:$0x1] %vm108, %v325
    %s328 = sld [smem:[#allocation8 + $0x7]]
    %s329 = scalar_lea.vmem %s8, %s328
    %v330 = vld [vmem:[%s329] sm:$0x1]
    %v332 = vperm.slane %v330, 0
    %333 = vrot.lane.b32.xlu0 %v332, 48
    %v334 = vpop.permute.xlu0 %333
    %336 = vst.msk [vmem:[#allocation2 + $0x7] sm:$0x1] %vm118, %v334
    %s337 = sld [smem:[#allocation9]]
    %s338 = scalar_lea.vmem %s9, %s337
    %v339 = vld [vmem:[%s338] sm:$0x1]
    %340 = vst.msk [vmem:[#allocation3] sm:$0x1] %vm88, %v339
    %s341 = sld [smem:[#allocation9 + $0x1]]
    %s342 = scalar_lea.vmem %s9, %s341
    %v343 = vld [vmem:[%s342] sm:$0x1]
    %344 = vst.msk [vmem:[#allocation3 + $0x1] sm:$0x1] %vm88, %v343
    %s345 = sld [smem:[#allocation9 + $0x2]]
    %s346 = scalar_lea.vmem %s9, %s345
    %v347 = vld [vmem:[%s346] sm:$0x1]
    %348 = vst.msk [vmem:[#allocation3 + $0x2] sm:$0x1] %vm88, %v347
    %s349 = sld [smem:[#allocation9 + $0x3]]
    %s350 = scalar_lea.vmem %s9, %s349
    %v351 = vld [vmem:[%s350] sm:$0x1]
    %352 = vst.msk [vmem:[#allocation3 + $0x3] sm:$0x1] %vm88, %v351
    %s353 = sld [smem:[#allocation9 + $0x4]]
    %s354 = scalar_lea.vmem %s9, %s353
    %v355 = vld [vmem:[%s354] sm:$0x1]
    %356 = vst.msk [vmem:[#allocation3 + $0x4] sm:$0x1] %vm88, %v355
    %s357 = sld [smem:[#allocation9 + $0x5]]
    %s358 = scalar_lea.vmem %s9, %s357
    %v359 = vld [vmem:[%s358] sm:$0x1]
    %360 = vst.msk [vmem:[#allocation3 + $0x5] sm:$0x1] %vm88, %v359
    %s361 = sld [smem:[#allocation9 + $0x6]]
    %s362 = scalar_lea.vmem %s9, %s361
    %v363 = vld [vmem:[%s362] sm:$0x1]
    %364 = vst.msk [vmem:[#allocation3 + $0x6] sm:$0x1] %vm88, %v363
    %s365 = sld [smem:[#allocation9 + $0x7]]
    %s366 = scalar_lea.vmem %s9, %s365
    %v367 = vld [vmem:[%s366] sm:$0x1]
    %368 = vst.msk [vmem:[#allocation3 + $0x7] sm:$0x1] %vm88, %v367
    %v369 = vld [vmem:[%s11] sm:$0xff]
    %v370 = vld [vmem:[%s10] sm:$0xff]
    %v371 = vld [vmem:[%s10 + $0x8] sm:$0xff]
    %v372 = vld [vmem:[%s10 + $0x10] sm:$0x3]
    %vm373 = vcmask 146432
    %v375 = vsel %vm373, %v369, 0
    %vm377 = vcmask 1041408
    %v379 = vsel %vm377, %v372, 0
    %381 = vmatpush.msra.mxu0 0.0
    %382 = vmatpush.msra.mxu0 0.0
    %383 = vmatpush.msra.mxu0 0.0
    %384 = vmatpush.msra.mxu0 0.0
    %385 = vmatpush.msra.mxu0 0.0
    %386 = vmatpush.msra.mxu0 0.0
    %387 = vmatpush.msra.mxu0 0.0
    %388 = vmatpush.msra.mxu0 0.0
    %389 = vmatpush.msra.mxu0 0.0
    %390 = vmatpush.msra.mxu0 0.0
    %391 = vmatpush.msra.mxu0 0.0
    %392 = vmatpush.msra.mxu0 0.0
    %393 = vmatpush.msra.mxu0 0.0
    %v394 = vand.u32 %v379, 4294901760
    %395 = vmatpush.msra.mxu0 %v394
    %v396 = vand.u32 %v371, 4294901760
    %397 = vmatpush.msra.mxu0 %v396
    %v398 = vand.u32 %v370, 4294901760
    %399 = vmatpush.msra.mxu0 %v398
    %v400 = vand.u32 %v375, 4294901760
    %v401 = vsub.f32 %v375, %v400
    %v402 = vand.u32 %v401, 4294901760
    %v403 = vsub.f32 %v401, %v402
    %v404 = vand.u32 %v403, 4294901760
    %405 = vmatmul.f32.gmra.mxu0 %v404
    %v406 = vpop.f32.mrf.mxu0
    %v407 = vadd.f32 0.0, %v406
    %408 = vdwg.mxu0
    %409 = vmatpush.msra.mxu0 0.0
    %410 = vmatpush.msra.mxu0 0.0
    %411 = vmatpush.msra.mxu0 0.0
    %412 = vmatpush.msra.mxu0 0.0
    %413 = vmatpush.msra.mxu0 0.0
    %414 = vmatpush.msra.mxu0 0.0
    %415 = vmatpush.msra.mxu0 0.0
    %416 = vmatpush.msra.mxu0 0.0
    %417 = vmatpush.msra.mxu0 0.0
    %418 = vmatpush.msra.mxu0 0.0
    %419 = vmatpush.msra.mxu0 0.0
    %420 = vmatpush.msra.mxu0 0.0
    %421 = vmatpush.msra.mxu0 0.0
    %v422 = vand.u32 %v379, 4294901760
    %v423 = vsub.f32 %v379, %v422
    %v424 = vand.u32 %v423, 4294901760
    %v425 = vsub.f32 %v423, %v424
    %v426 = vand.u32 %v425, 4294901760
    %427 = vmatpush.msra.mxu0 %v426
    %v428 = vand.u32 %v371, 4294901760
    %v429 = vsub.f32 %v371, %v428
    %v430 = vand.u32 %v429, 4294901760
    %v431 = vsub.f32 %v429, %v430
    %v432 = vand.u32 %v431, 4294901760
    %433 = vmatpush.msra.mxu0 %v432
    %v434 = vand.u32 %v370, 4294901760
    %v435 = vsub.f32 %v370, %v434
    %v436 = vand.u32 %v435, 4294901760
    %v437 = vsub.f32 %v435, %v436
    %v438 = vand.u32 %v437, 4294901760
    %439 = vmatpush.msra.mxu0 %v438
    %v440 = vand.u32 %v375, 4294901760
    %441 = vmatmul.f32.gmra.mxu0 %v440
    %v442 = vpop.f32.mrf.mxu0
    %v443 = vadd.f32 %v407, %v442
    %444 = vdwg.mxu0
    %445 = vmatpush.msra.mxu0 0.0
    %446 = vmatpush.msra.mxu0 0.0
    %447 = vmatpush.msra.mxu0 0.0
    %448 = vmatpush.msra.mxu0 0.0
    %449 = vmatpush.msra.mxu0 0.0
    %450 = vmatpush.msra.mxu0 0.0
    %451 = vmatpush.msra.mxu0 0.0
    %452 = vmatpush.msra.mxu0 0.0
    %453 = vmatpush.msra.mxu0 0.0
    %454 = vmatpush.msra.mxu0 0.0
    %455 = vmatpush.msra.mxu0 0.0
    %456 = vmatpush.msra.mxu0 0.0
    %457 = vmatpush.msra.mxu0 0.0
    %v458 = vand.u32 %v379, 4294901760
    %v459 = vsub.f32 %v379, %v458
    %460 = vmatpush.msra.mxu0 %v459
    %v461 = vand.u32 %v371, 4294901760
    %v462 = vsub.f32 %v371, %v461
    %463 = vmatpush.msra.mxu0 %v462
    %v464 = vand.u32 %v370, 4294901760
    %v465 = vsub.f32 %v370, %v464
    %466 = vmatpush.msra.mxu0 %v465
    %v467 = vand.u32 %v375, 4294901760
    %v468 = vsub.f32 %v375, %v467
    %469 = vmatmul.f32.gmra.mxu0 %v468
    %v470 = vpop.f32.mrf.mxu0
    %v471 = vadd.f32 %v443, %v470
    %472 = vdwg.mxu0
    %473 = vmatpush.msra.mxu0 0.0
    %474 = vmatpush.msra.mxu0 0.0
    %475 = vmatpush.msra.mxu0 0.0
    %476 = vmatpush.msra.mxu0 0.0
    %477 = vmatpush.msra.mxu0 0.0
    %478 = vmatpush.msra.mxu0 0.0
    %479 = vmatpush.msra.mxu0 0.0
    %480 = vmatpush.msra.mxu0 0.0
    %481 = vmatpush.msra.mxu0 0.0
    %482 = vmatpush.msra.mxu0 0.0
    %483 = vmatpush.msra.mxu0 0.0
    %484 = vmatpush.msra.mxu0 0.0
    %485 = vmatpush.msra.mxu0 0.0
    %v486 = vand.u32 %v379, 4294901760
    %487 = vmatpush.msra.mxu0 %v486
    %v488 = vand.u32 %v371, 4294901760
    %489 = vmatpush.msra.mxu0 %v488
    %v490 = vand.u32 %v370, 4294901760
    %491 = vmatpush.msra.mxu0 %v490
    %v492 = vand.u32 %v375, 4294901760
    %v493 = vsub.f32 %v375, %v492
    %v494 = vand.u32 %v493, 4294901760
    %495 = vmatmul.f32.gmra.mxu0 %v494
    %v496 = vpop.f32.mrf.mxu0
    %v497 = vadd.f32 %v471, %v496
    %498 = vdwg.mxu0
    %499 = vmatpush.msra.mxu0 0.0
    %500 = vmatpush.msra.mxu0 0.0
    %501 = vmatpush.msra.mxu0 0.0
    %502 = vmatpush.msra.mxu0 0.0
    %503 = vmatpush.msra.mxu0 0.0
    %504 = vmatpush.msra.mxu0 0.0
    %505 = vmatpush.msra.mxu0 0.0
    %506 = vmatpush.msra.mxu0 0.0
    %507 = vmatpush.msra.mxu0 0.0
    %508 = vmatpush.msra.mxu0 0.0
    %509 = vmatpush.msra.mxu0 0.0
    %510 = vmatpush.msra.mxu0 0.0
    %511 = vmatpush.msra.mxu0 0.0
    %v512 = vand.u32 %v379, 4294901760
    %v513 = vsub.f32 %v379, %v512
    %v514 = vand.u32 %v513, 4294901760
    %515 = vmatpush.msra.mxu0 %v514
    %v516 = vand.u32 %v371, 4294901760
    %v517 = vsub.f32 %v371, %v516
    %v518 = vand.u32 %v517, 4294901760
    %519 = vmatpush.msra.mxu0 %v518
    %v520 = vand.u32 %v370, 4294901760
    %v521 = vsub.f32 %v370, %v520
    %v522 = vand.u32 %v521, 4294901760
    %523 = vmatpush.msra.mxu0 %v522
    %v524 = vand.u32 %v375, 4294901760
    %525 = vmatmul.f32.gmra.mxu0 %v524
    %v526 = vpop.f32.mrf.mxu0
    %v527 = vadd.f32 %v497, %v526
    %528 = vdwg.mxu0
    %529 = vmatpush.msra.mxu0 0.0
    %530 = vmatpush.msra.mxu0 0.0
    %531 = vmatpush.msra.mxu0 0.0
    %532 = vmatpush.msra.mxu0 0.0
    %533 = vmatpush.msra.mxu0 0.0
    %534 = vmatpush.msra.mxu0 0.0
    %535 = vmatpush.msra.mxu0 0.0
    %536 = vmatpush.msra.mxu0 0.0
    %537 = vmatpush.msra.mxu0 0.0
    %538 = vmatpush.msra.mxu0 0.0
    %539 = vmatpush.msra.mxu0 0.0
    %540 = vmatpush.msra.mxu0 0.0
    %541 = vmatpush.msra.mxu0 0.0
    %v542 = vand.u32 %v379, 4294901760
    %543 = vmatpush.msra.mxu0 %v542
    %v544 = vand.u32 %v371, 4294901760
    %545 = vmatpush.msra.mxu0 %v544
    %v546 = vand.u32 %v370, 4294901760
    %547 = vmatpush.msra.mxu0 %v546
    %v548 = vand.u32 %v375, 4294901760
    %549 = vmatmul.f32.gmra.mxu0 %v548
    %v550 = vpop.f32.mrf.mxu0
    %v551 = vadd.f32 %v527, %v550
    %552 = vdwg.mxu0
    %554 = vrot.lane.b32.xlu0 %v551, 16
    %v555 = vpop.permute.xlu0 %554
    %vm557 = vcmask 261248
    %558 = vst.msk [vmem:[#allocation3] sm:$0xff] %vm557, %v555
    %v559 = vld [vmem:[#allocation2] sm:$0xff]
    %v560 = vld [vmem:[%s12] sm:$0xff]
    %v561 = vld [vmem:[%s12 + $0x8] sm:$0xff]
    %v562 = vld [vmem:[%s12 + $0x10] sm:$0xff]
    %v563 = vld [vmem:[%s12 + $0x18] sm:$0xff]
    %v564 = vld [vmem:[%s12 + $0x20] sm:$0xff]
    %v565 = vld [vmem:[%s12 + $0x28] sm:$0xff]
    %v566 = vld [vmem:[%s12 + $0x30] sm:$0xff]
    %v567 = vld [vmem:[%s12 + $0x38] sm:$0xff]
    %v569 = vsel %vm66, %v559, 0
    %571 = vmatpush.msra.mxu0 0.0
    %572 = vmatpush.msra.mxu0 0.0
    %573 = vmatpush.msra.mxu0 0.0
    %574 = vmatpush.msra.mxu0 0.0
    %575 = vmatpush.msra.mxu0 0.0
    %576 = vmatpush.msra.mxu0 0.0
    %577 = vmatpush.msra.mxu0 0.0
    %578 = vmatpush.msra.mxu0 0.0
    %v579 = vand.u32 %v567, 4294901760
    %580 = vmatpush.msra.mxu0 %v579
    %v581 = vand.u32 %v566, 4294901760
    %582 = vmatpush.msra.mxu0 %v581
    %v583 = vand.u32 %v565, 4294901760
    %584 = vmatpush.msra.mxu0 %v583
    %v585 = vand.u32 %v564, 4294901760
    %586 = vmatpush.msra.mxu0 %v585
    %v587 = vand.u32 %v563, 4294901760
    %588 = vmatpush.msra.mxu0 %v587
    %v589 = vand.u32 %v562, 4294901760
    %590 = vmatpush.msra.mxu0 %v589
    %v591 = vand.u32 %v561, 4294901760
    %592 = vmatpush.msra.mxu0 %v591
    %v593 = vand.u32 %v560, 4294901760
    %594 = vmatpush.msra.mxu0 %v593
    %v595 = vand.u32 %v569, 4294901760
    %v596 = vsub.f32 %v569, %v595
    %v597 = vand.u32 %v596, 4294901760
    %v598 = vsub.f32 %v596, %v597
    %v599 = vand.u32 %v598, 4294901760
    %600 = vmatmul.f32.gmra.mxu0 %v599
    %v601 = vpop.f32.mrf.mxu0
    %v602 = vadd.f32 0.0, %v601
    %603 = vdwg.mxu0
    %604 = vmatpush.msra.mxu0 0.0
    %605 = vmatpush.msra.mxu0 0.0
    %606 = vmatpush.msra.mxu0 0.0
    %607 = vmatpush.msra.mxu0 0.0
    %608 = vmatpush.msra.mxu0 0.0
    %609 = vmatpush.msra.mxu0 0.0
    %610 = vmatpush.msra.mxu0 0.0
    %611 = vmatpush.msra.mxu0 0.0
    %v612 = vand.u32 %v567, 4294901760
    %v613 = vsub.f32 %v567, %v612
    %v614 = vand.u32 %v613, 4294901760
    %v615 = vsub.f32 %v613, %v614
    %v616 = vand.u32 %v615, 4294901760
    %617 = vmatpush.msra.mxu0 %v616
    %v618 = vand.u32 %v566, 4294901760
    %v619 = vsub.f32 %v566, %v618
    %v620 = vand.u32 %v619, 4294901760
    %v621 = vsub.f32 %v619, %v620
    %v622 = vand.u32 %v621, 4294901760
    %623 = vmatpush.msra.mxu0 %v622
    %v624 = vand.u32 %v565, 4294901760
    %v625 = vsub.f32 %v565, %v624
    %v626 = vand.u32 %v625, 4294901760
    %v627 = vsub.f32 %v625, %v626
    %v628 = vand.u32 %v627, 4294901760
    %629 = vmatpush.msra.mxu0 %v628
    %v630 = vand.u32 %v564, 4294901760
    %v631 = vsub.f32 %v564, %v630
    %v632 = vand.u32 %v631, 4294901760
    %v633 = vsub.f32 %v631, %v632
    %v634 = vand.u32 %v633, 4294901760
    %635 = vmatpush.msra.mxu0 %v634
    %v636 = vand.u32 %v563, 4294901760
    %v637 = vsub.f32 %v563, %v636
    %v638 = vand.u32 %v637, 4294901760
    %v639 = vsub.f32 %v637, %v638
    %v640 = vand.u32 %v639, 4294901760
    %641 = vmatpush.msra.mxu0 %v640
    %v642 = vand.u32 %v562, 4294901760
    %v643 = vsub.f32 %v562, %v642
    %v644 = vand.u32 %v643, 4294901760
    %v645 = vsub.f32 %v643, %v644
    %v646 = vand.u32 %v645, 4294901760
    %647 = vmatpush.msra.mxu0 %v646
    %v648 = vand.u32 %v561, 4294901760
    %v649 = vsub.f32 %v561, %v648
    %v650 = vand.u32 %v649, 4294901760
    %v651 = vsub.f32 %v649, %v650
    %v652 = vand.u32 %v651, 4294901760
    %653 = vmatpush.msra.mxu0 %v652
    %v654 = vand.u32 %v560, 4294901760
    %v655 = vsub.f32 %v560, %v654
    %v656 = vand.u32 %v655, 4294901760
    %v657 = vsub.f32 %v655, %v656
    %v658 = vand.u32 %v657, 4294901760
    %659 = vmatpush.msra.mxu0 %v658
    %v660 = vand.u32 %v569, 4294901760
    %661 = vmatmul.f32.gmra.mxu0 %v660
    %v662 = vpop.f32.mrf.mxu0
    %v663 = vadd.f32 %v602, %v662
    %664 = vdwg.mxu0
    %665 = vmatpush.msra.mxu0 0.0
    %666 = vmatpush.msra.mxu0 0.0
    %667 = vmatpush.msra.mxu0 0.0
    %668 = vmatpush.msra.mxu0 0.0
    %669 = vmatpush.msra.mxu0 0.0
    %670 = vmatpush.msra.mxu0 0.0
    %671 = vmatpush.msra.mxu0 0.0
    %672 = vmatpush.msra.mxu0 0.0
    %v673 = vand.u32 %v567, 4294901760
    %v674 = vsub.f32 %v567, %v673
    %675 = vmatpush.msra.mxu0 %v674
    %v676 = vand.u32 %v566, 4294901760
    %v677 = vsub.f32 %v566, %v676
    %678 = vmatpush.msra.mxu0 %v677
    %v679 = vand.u32 %v565, 4294901760
    %v680 = vsub.f32 %v565, %v679
    %681 = vmatpush.msra.mxu0 %v680
    %v682 = vand.u32 %v564, 4294901760
    %v683 = vsub.f32 %v564, %v682
    %684 = vmatpush.msra.mxu0 %v683
    %v685 = vand.u32 %v563, 4294901760
    %v686 = vsub.f32 %v563, %v685
    %687 = vmatpush.msra.mxu0 %v686
    %v688 = vand.u32 %v562, 4294901760
    %v689 = vsub.f32 %v562, %v688
    %690 = vmatpush.msra.mxu0 %v689
    %v691 = vand.u32 %v561, 4294901760
    %v692 = vsub.f32 %v561, %v691
    %693 = vmatpush.msra.mxu0 %v692
    %v694 = vand.u32 %v560, 4294901760
    %v695 = vsub.f32 %v560, %v694
    %696 = vmatpush.msra.mxu0 %v695
    %v697 = vand.u32 %v569, 4294901760
    %v698 = vsub.f32 %v569, %v697
    %699 = vmatmul.f32.gmra.mxu0 %v698
    %v700 = vpop.f32.mrf.mxu0
    %v701 = vadd.f32 %v663, %v700
    %702 = vdwg.mxu0
    %703 = vmatpush.msra.mxu0 0.0
    %704 = vmatpush.msra.mxu0 0.0
    %705 = vmatpush.msra.mxu0 0.0
    %706 = vmatpush.msra.mxu0 0.0
    %707 = vmatpush.msra.mxu0 0.0
    %708 = vmatpush.msra.mxu0 0.0
    %709 = vmatpush.msra.mxu0 0.0
    %710 = vmatpush.msra.mxu0 0.0
    %v711 = vand.u32 %v567, 4294901760
    %712 = vmatpush.msra.mxu0 %v711
    %v713 = vand.u32 %v566, 4294901760
    %714 = vmatpush.msra.mxu0 %v713
    %v715 = vand.u32 %v565, 4294901760
    %716 = vmatpush.msra.mxu0 %v715
    %v717 = vand.u32 %v564, 4294901760
    %718 = vmatpush.msra.mxu0 %v717
    %v719 = vand.u32 %v563, 4294901760
    %720 = vmatpush.msra.mxu0 %v719
    %v721 = vand.u32 %v562, 4294901760
    %722 = vmatpush.msra.mxu0 %v721
    %v723 = vand.u32 %v561, 4294901760
    %724 = vmatpush.msra.mxu0 %v723
    %v725 = vand.u32 %v560, 4294901760
    %726 = vmatpush.msra.mxu0 %v725
    %v727 = vand.u32 %v569, 4294901760
    %v728 = vsub.f32 %v569, %v727
    %v729 = vand.u32 %v728, 4294901760
    %730 = vmatmul.f32.gmra.mxu0 %v729
    %v731 = vpop.f32.mrf.mxu0
    %v732 = vadd.f32 %v701, %v731
    %733 = vdwg.mxu0
    %734 = vmatpush.msra.mxu0 0.0
    %735 = vmatpush.msra.mxu0 0.0
    %736 = vmatpush.msra.mxu0 0.0
    %737 = vmatpush.msra.mxu0 0.0
    %738 = vmatpush.msra.mxu0 0.0
    %739 = vmatpush.msra.mxu0 0.0
    %740 = vmatpush.msra.mxu0 0.0
    %741 = vmatpush.msra.mxu0 0.0
    %v742 = vand.u32 %v567, 4294901760
    %v743 = vsub.f32 %v567, %v742
    %v744 = vand.u32 %v743, 4294901760
    %745 = vmatpush.msra.mxu0 %v744
    %v746 = vand.u32 %v566, 4294901760
    %v747 = vsub.f32 %v566, %v746
    %v748 = vand.u32 %v747, 4294901760
    %749 = vmatpush.msra.mxu0 %v748
    %v750 = vand.u32 %v565, 4294901760
    %v751 = vsub.f32 %v565, %v750
    %v752 = vand.u32 %v751, 4294901760
    %753 = vmatpush.msra.mxu0 %v752
    %v754 = vand.u32 %v564, 4294901760
    %v755 = vsub.f32 %v564, %v754
    %v756 = vand.u32 %v755, 4294901760
    %757 = vmatpush.msra.mxu0 %v756
    %v758 = vand.u32 %v563, 4294901760
    %v759 = vsub.f32 %v563, %v758
    %v760 = vand.u32 %v759, 4294901760
    %761 = vmatpush.msra.mxu0 %v760
    %v762 = vand.u32 %v562, 4294901760
    %v763 = vsub.f32 %v562, %v762
    %v764 = vand.u32 %v763, 4294901760
    %765 = vmatpush.msra.mxu0 %v764
    %v766 = vand.u32 %v561, 4294901760
    %v767 = vsub.f32 %v561, %v766
    %v768 = vand.u32 %v767, 4294901760
    %769 = vmatpush.msra.mxu0 %v768
    %v770 = vand.u32 %v560, 4294901760
    %v771 = vsub.f32 %v560, %v770
    %v772 = vand.u32 %v771, 4294901760
    %773 = vmatpush.msra.mxu0 %v772
    %v774 = vand.u32 %v569, 4294901760
    %775 = vmatmul.f32.gmra.mxu0 %v774
    %v776 = vpop.f32.mrf.mxu0
    %v777 = vadd.f32 %v732, %v776
    %778 = vdwg.mxu0
    %779 = vmatpush.msra.mxu0 0.0
    %780 = vmatpush.msra.mxu0 0.0
    %781 = vmatpush.msra.mxu0 0.0
    %782 = vmatpush.msra.mxu0 0.0
    %783 = vmatpush.msra.mxu0 0.0
    %784 = vmatpush.msra.mxu0 0.0
    %785 = vmatpush.msra.mxu0 0.0
    %786 = vmatpush.msra.mxu0 0.0
    %v787 = vand.u32 %v567, 4294901760
    %788 = vmatpush.msra.mxu0 %v787
    %v789 = vand.u32 %v566, 4294901760
    %790 = vmatpush.msra.mxu0 %v789
    %v791 = vand.u32 %v565, 4294901760
    %792 = vmatpush.msra.mxu0 %v791
    %v793 = vand.u32 %v564, 4294901760
    %794 = vmatpush.msra.mxu0 %v793
    %v795 = vand.u32 %v563, 4294901760
    %796 = vmatpush.msra.mxu0 %v795
    %v797 = vand.u32 %v562, 4294901760
    %798 = vmatpush.msra.mxu0 %v797
    %v799 = vand.u32 %v561, 4294901760
    %800 = vmatpush.msra.mxu0 %v799
    %v801 = vand.u32 %v560, 4294901760
    %802 = vmatpush.msra.mxu0 %v801
    %v803 = vand.u32 %v569, 4294901760
    %804 = vmatmul.f32.gmra.mxu0 %v803
    %v805 = vpop.f32.mrf.mxu0
    %v806 = vadd.f32 %v777, %v805
    %807 = vdwg.mxu0
    %v808 = vtanh.pop %v806
    %v809 = vld [vmem:[#allocation3] sm:$0xff]
    %v810 = vld [vmem:[#allocation3 + $0x8] sm:$0xff]
    %v811 = vld [vmem:[#allocation3 + $0x10] sm:$0xff]
    %v812 = vld [vmem:[#allocation3 + $0x18] sm:$0xff]
    %v813 = vld [vmem:[#allocation3 + $0x20] sm:$0xff]
    %v814 = vld [vmem:[#allocation3 + $0x28] sm:$0xff]
    %v815 = vld [vmem:[#allocation3 + $0x30] sm:$0xff]
    %v816 = vld [vmem:[#allocation3 + $0x38] sm:$0xff]
    %v817 = vld [vmem:[#allocation3 + $0x40] sm:$0xff]
    %v818 = vld [vmem:[#allocation3 + $0x48] sm:$0xff]
    %v819 = vld [vmem:[#allocation3 + $0x50] sm:$0xff]
    %v820 = vld [vmem:[#allocation3 + $0x58] sm:$0xff]
    %v821 = vld [vmem:[#allocation3 + $0x60] sm:$0xff]
    %v822 = vld [vmem:[#allocation3 + $0x68] sm:$0xff]
    %v823 = vld [vmem:[#allocation3 + $0x70] sm:$0xff]
    %v824 = vld [vmem:[#allocation3 + $0x78] sm:$0xff]
    %v825 = vld [vmem:[%s13] sm:$0xff]
    %v826 = vld [vmem:[%s13 + $0x8] sm:$0xff]
    %v827 = vld [vmem:[%s13 + $0x10] sm:$0xff]
    %v828 = vld [vmem:[%s13 + $0x18] sm:$0xff]
    %v830 = vsel %vm68, %v809, 0
    %v833 = vsel %vm68, %v810, 0
    %v836 = vsel %vm68, %v811, 0
    %v839 = vsel %vm68, %v812, 0
    %v842 = vsel %vm68, %v813, 0
    %v845 = vsel %vm68, %v814, 0
    %v848 = vsel %vm68, %v815, 0
    %v851 = vsel %vm68, %v816, 0
    %v854 = vsel %vm68, %v817, 0
    %v857 = vsel %vm68, %v818, 0
    %v860 = vsel %vm68, %v819, 0
    %v863 = vsel %vm68, %v820, 0
    %v866 = vsel %vm68, %v821, 0
    %v869 = vsel %vm68, %v822, 0
    %v872 = vsel %vm68, %v823, 0
    %v875 = vsel %vm68, %v824, 0
    %877 = vmatpush.msra.mxu0 0.0
    %878 = vmatpush.msra.mxu0 0.0
    %879 = vmatpush.msra.mxu0 0.0
    %880 = vmatpush.msra.mxu0 0.0
    %881 = vmatpush.msra.mxu0 0.0
    %882 = vmatpush.msra.mxu0 0.0
    %883 = vmatpush.msra.mxu0 0.0
    %884 = vmatpush.msra.mxu0 0.0
    %885 = vmatpush.msra.mxu0 0.0
    %886 = vmatpush.msra.mxu0 0.0
    %887 = vmatpush.msra.mxu0 0.0
    %888 = vmatpush.msra.mxu0 0.0
    %v889 = vand.u32 %v828, 4294901760
    %890 = vmatpush.msra.mxu0 %v889
    %v891 = vand.u32 %v827, 4294901760
    %892 = vmatpush.msra.mxu0 %v891
    %v893 = vand.u32 %v826, 4294901760
    %894 = vmatpush.msra.mxu0 %v893
    %v895 = vand.u32 %v825, 4294901760
    %896 = vmatpush.msra.mxu0 %v895
    %v897 = vand.u32 %v830, 4294901760
    %v898 = vsub.f32 %v830, %v897
    %v899 = vand.u32 %v898, 4294901760
    %v900 = vsub.f32 %v898, %v899
    %v901 = vand.u32 %v900, 4294901760
    %902 = vmatmul.f32.gmra.mxu0 %v901
    %v903 = vpop.f32.mrf.mxu0
    %v904 = vadd.f32 0.0, %v903
    %v905 = vand.u32 %v833, 4294901760
    %v906 = vsub.f32 %v833, %v905
    %v907 = vand.u32 %v906, 4294901760
    %v908 = vsub.f32 %v906, %v907
    %v909 = vand.u32 %v908, 4294901760
    %910 = vmatmul.f32.gmra.mxu0 %v909
    %v911 = vpop.f32.mrf.mxu0
    %v912 = vadd.f32 0.0, %v911
    %v913 = vand.u32 %v836, 4294901760
    %v914 = vsub.f32 %v836, %v913
    %v915 = vand.u32 %v914, 4294901760
    %v916 = vsub.f32 %v914, %v915
    %v917 = vand.u32 %v916, 4294901760
    %918 = vmatmul.f32.gmra.mxu0 %v917
    %v919 = vpop.f32.mrf.mxu0
    %v920 = vadd.f32 0.0, %v919
    %v921 = vand.u32 %v839, 4294901760
    %v922 = vsub.f32 %v839, %v921
    %v923 = vand.u32 %v922, 4294901760
    %v924 = vsub.f32 %v922, %v923
    %v925 = vand.u32 %v924, 4294901760
    %926 = vmatmul.f32.gmra.mxu0 %v925
    %v927 = vpop.f32.mrf.mxu0
    %v928 = vadd.f32 0.0, %v927
    %v929 = vand.u32 %v842, 4294901760
    %v930 = vsub.f32 %v842, %v929
    %v931 = vand.u32 %v930, 4294901760
    %v932 = vsub.f32 %v930, %v931
    %v933 = vand.u32 %v932, 4294901760
    %934 = vmatmul.f32.gmra.mxu0 %v933
    %v935 = vpop.f32.mrf.mxu0
    %v936 = vadd.f32 0.0, %v935
    %v937 = vand.u32 %v845, 4294901760
    %v938 = vsub.f32 %v845, %v937
    %v939 = vand.u32 %v938, 4294901760
    %v940 = vsub.f32 %v938, %v939
    %v941 = vand.u32 %v940, 4294901760
    %942 = vmatmul.f32.gmra.mxu0 %v941
    %v943 = vpop.f32.mrf.mxu0
    %v944 = vadd.f32 0.0, %v943
    %v945 = vand.u32 %v848, 4294901760
    %v946 = vsub.f32 %v848, %v945
    %v947 = vand.u32 %v946, 4294901760
    %v948 = vsub.f32 %v946, %v947
    %v949 = vand.u32 %v948, 4294901760
    %950 = vmatmul.f32.gmra.mxu0 %v949
    %v951 = vpop.f32.mrf.mxu0
    %v952 = vadd.f32 0.0, %v951
    %v953 = vand.u32 %v851, 4294901760
    %v954 = vsub.f32 %v851, %v953
    %v955 = vand.u32 %v954, 4294901760
    %v956 = vsub.f32 %v954, %v955
    %v957 = vand.u32 %v956, 4294901760
    %958 = vmatmul.f32.gmra.mxu0 %v957
    %v959 = vpop.f32.mrf.mxu0
    %v960 = vadd.f32 0.0, %v959
    %v961 = vand.u32 %v854, 4294901760
    %v962 = vsub.f32 %v854, %v961
    %v963 = vand.u32 %v962, 4294901760
    %v964 = vsub.f32 %v962, %v963
    %v965 = vand.u32 %v964, 4294901760
    %966 = vmatmul.f32.gmra.mxu0 %v965
    %v967 = vpop.f32.mrf.mxu0
    %v968 = vadd.f32 0.0, %v967
    %v969 = vand.u32 %v857, 4294901760
    %v970 = vsub.f32 %v857, %v969
    %v971 = vand.u32 %v970, 4294901760
    %v972 = vsub.f32 %v970, %v971
    %v973 = vand.u32 %v972, 4294901760
    %974 = vmatmul.f32.gmra.mxu0 %v973
    %v975 = vpop.f32.mrf.mxu0
    %v976 = vadd.f32 0.0, %v975
    %v977 = vand.u32 %v860, 4294901760
    %v978 = vsub.f32 %v860, %v977
    %v979 = vand.u32 %v978, 4294901760
    %v980 = vsub.f32 %v978, %v979
    %v981 = vand.u32 %v980, 4294901760
    %982 = vmatmul.f32.gmra.mxu0 %v981
    %v983 = vpop.f32.mrf.mxu0
    %v984 = vadd.f32 0.0, %v983
    %v985 = vand.u32 %v863, 4294901760
    %v986 = vsub.f32 %v863, %v985
    %v987 = vand.u32 %v986, 4294901760
    %v988 = vsub.f32 %v986, %v987
    %v989 = vand.u32 %v988, 4294901760
    %990 = vmatmul.f32.gmra.mxu0 %v989
    %v991 = vpop.f32.mrf.mxu0
    %v992 = vadd.f32 0.0, %v991
    %v993 = vand.u32 %v866, 4294901760
    %v994 = vsub.f32 %v866, %v993
    %v995 = vand.u32 %v994, 4294901760
    %v996 = vsub.f32 %v994, %v995
    %v997 = vand.u32 %v996, 4294901760
    %998 = vmatmul.f32.gmra.mxu0 %v997
    %v999 = vpop.f32.mrf.mxu0
    %v1000 = vadd.f32 0.0, %v999
    %v1001 = vand.u32 %v869, 4294901760
    %v1002 = vsub.f32 %v869, %v1001
    %v1003 = vand.u32 %v1002, 4294901760
    %v1004 = vsub.f32 %v1002, %v1003
    %v1005 = vand.u32 %v1004, 4294901760
    %1006 = vmatmul.f32.gmra.mxu0 %v1005
    %v1007 = vpop.f32.mrf.mxu0
    %v1008 = vadd.f32 0.0, %v1007
    %v1009 = vand.u32 %v872, 4294901760
    %v1010 = vsub.f32 %v872, %v1009
    %v1011 = vand.u32 %v1010, 4294901760
    %v1012 = vsub.f32 %v1010, %v1011
    %v1013 = vand.u32 %v1012, 4294901760
    %1014 = vmatmul.f32.gmra.mxu0 %v1013
    %v1015 = vpop.f32.mrf.mxu0
    %v1016 = vadd.f32 0.0, %v1015
    %v1017 = vand.u32 %v875, 4294901760
    %v1018 = vsub.f32 %v875, %v1017
    %v1019 = vand.u32 %v1018, 4294901760
    %v1020 = vsub.f32 %v1018, %v1019
    %v1021 = vand.u32 %v1020, 4294901760
    %1022 = vmatmul.f32.gmra.mxu0 %v1021
    %v1023 = vpop.f32.mrf.mxu0
    %v1024 = vadd.f32 0.0, %v1023
    %1025 = vdwg.mxu0
    %1026 = vmatpush.msra.mxu0 0.0
    %1027 = vmatpush.msra.mxu0 0.0
    %1028 = vmatpush.msra.mxu0 0.0
    %1029 = vmatpush.msra.mxu0 0.0
    %1030 = vmatpush.msra.mxu0 0.0
    %1031 = vmatpush.msra.mxu0 0.0
    %1032 = vmatpush.msra.mxu0 0.0
    %1033 = vmatpush.msra.mxu0 0.0
    %1034 = vmatpush.msra.mxu0 0.0
    %1035 = vmatpush.msra.mxu0 0.0
    %1036 = vmatpush.msra.mxu0 0.0
    %1037 = vmatpush.msra.mxu0 0.0
    %v1038 = vand.u32 %v828, 4294901760
    %v1039 = vsub.f32 %v828, %v1038
    %v1040 = vand.u32 %v1039, 4294901760
    %v1041 = vsub.f32 %v1039, %v1040
    %v1042 = vand.u32 %v1041, 4294901760
    %1043 = vmatpush.msra.mxu0 %v1042
    %v1044 = vand.u32 %v827, 4294901760
    %v1045 = vsub.f32 %v827, %v1044
    %v1046 = vand.u32 %v1045, 4294901760
    %v1047 = vsub.f32 %v1045, %v1046
    %v1048 = vand.u32 %v1047, 4294901760
    %1049 = vmatpush.msra.mxu0 %v1048
    %v1050 = vand.u32 %v826, 4294901760
    %v1051 = vsub.f32 %v826, %v1050
    %v1052 = vand.u32 %v1051, 4294901760
    %v1053 = vsub.f32 %v1051, %v1052
    %v1054 = vand.u32 %v1053, 4294901760
    %1055 = vmatpush.msra.mxu0 %v1054
    %v1056 = vand.u32 %v825, 4294901760
    %v1057 = vsub.f32 %v825, %v1056
    %v1058 = vand.u32 %v1057, 4294901760
    %v1059 = vsub.f32 %v1057, %v1058
    %v1060 = vand.u32 %v1059, 4294901760
    %1061 = vmatpush.msra.mxu0 %v1060
    %v1062 = vand.u32 %v830, 4294901760
    %1063 = vmatmul.f32.gmra.mxu0 %v1062
    %v1064 = vpop.f32.mrf.mxu0
    %v1065 = vadd.f32 %v904, %v1064
    %v1066 = vand.u32 %v833, 4294901760
    %1067 = vmatmul.f32.gmra.mxu0 %v1066
    %v1068 = vpop.f32.mrf.mxu0
    %v1069 = vadd.f32 %v912, %v1068
    %v1070 = vand.u32 %v836, 4294901760
    %1071 = vmatmul.f32.gmra.mxu0 %v1070
    %v1072 = vpop.f32.mrf.mxu0
    %v1073 = vadd.f32 %v920, %v1072
    %v1074 = vand.u32 %v839, 4294901760
    %1075 = vmatmul.f32.gmra.mxu0 %v1074
    %v1076 = vpop.f32.mrf.mxu0
    %v1077 = vadd.f32 %v928, %v1076
    %v1078 = vand.u32 %v842, 4294901760
    %1079 = vmatmul.f32.gmra.mxu0 %v1078
    %v1080 = vpop.f32.mrf.mxu0
    %v1081 = vadd.f32 %v936, %v1080
    %v1082 = vand.u32 %v845, 4294901760
    %1083 = vmatmul.f32.gmra.mxu0 %v1082
    %v1084 = vpop.f32.mrf.mxu0
    %v1085 = vadd.f32 %v944, %v1084
    %v1086 = vand.u32 %v848, 4294901760
    %1087 = vmatmul.f32.gmra.mxu0 %v1086
    %v1088 = vpop.f32.mrf.mxu0
    %v1089 = vadd.f32 %v952, %v1088
    %v1090 = vand.u32 %v851, 4294901760
    %1091 = vmatmul.f32.gmra.mxu0 %v1090
    %v1092 = vpop.f32.mrf.mxu0
    %v1093 = vadd.f32 %v960, %v1092
    %v1094 = vand.u32 %v854, 4294901760
    %1095 = vmatmul.f32.gmra.mxu0 %v1094
    %v1096 = vpop.f32.mrf.mxu0
    %v1097 = vadd.f32 %v968, %v1096
    %v1098 = vand.u32 %v857, 4294901760
    %1099 = vmatmul.f32.gmra.mxu0 %v1098
    %v1100 = vpop.f32.mrf.mxu0
    %v1101 = vadd.f32 %v976, %v1100
    %v1102 = vand.u32 %v860, 4294901760
    %1103 = vmatmul.f32.gmra.mxu0 %v1102
    %v1104 = vpop.f32.mrf.mxu0
    %v1105 = vadd.f32 %v984, %v1104
    %v1106 = vand.u32 %v863, 4294901760
    %1107 = vmatmul.f32.gmra.mxu0 %v1106
    %v1108 = vpop.f32.mrf.mxu0
    %v1109 = vadd.f32 %v992, %v1108
    %v1110 = vand.u32 %v866, 4294901760
    %1111 = vmatmul.f32.gmra.mxu0 %v1110
    %v1112 = vpop.f32.mrf.mxu0
    %v1113 = vadd.f32 %v1000, %v1112
    %v1114 = vand.u32 %v869, 4294901760
    %1115 = vmatmul.f32.gmra.mxu0 %v1114
    %v1116 = vpop.f32.mrf.mxu0
    %v1117 = vadd.f32 %v1008, %v1116
    %v1118 = vand.u32 %v872, 4294901760
    %1119 = vmatmul.f32.gmra.mxu0 %v1118
    %v1120 = vpop.f32.mrf.mxu0
    %v1121 = vadd.f32 %v1016, %v1120
    %v1122 = vand.u32 %v875, 4294901760
    %1123 = vmatmul.f32.gmra.mxu0 %v1122
    %v1124 = vpop.f32.mrf.mxu0
    %v1125 = vadd.f32 %v1024, %v1124
    %1126 = vdwg.mxu0
    %1127 = vmatpush.msra.mxu0 0.0
    %1128 = vmatpush.msra.mxu0 0.0
    %1129 = vmatpush.msra.mxu0 0.0
    %1130 = vmatpush.msra.mxu0 0.0
    %1131 = vmatpush.msra.mxu0 0.0
    %1132 = vmatpush.msra.mxu0 0.0
    %1133 = vmatpush.msra.mxu0 0.0
    %1134 = vmatpush.msra.mxu0 0.0
    %1135 = vmatpush.msra.mxu0 0.0
    %1136 = vmatpush.msra.mxu0 0.0
    %1137 = vmatpush.msra.mxu0 0.0
    %1138 = vmatpush.msra.mxu0 0.0
    %v1139 = vand.u32 %v828, 4294901760
    %v1140 = vsub.f32 %v828, %v1139
    %1141 = vmatpush.msra.mxu0 %v1140
    %v1142 = vand.u32 %v827, 4294901760
    %v1143 = vsub.f32 %v827, %v1142
    %1144 = vmatpush.msra.mxu0 %v1143
    %v1145 = vand.u32 %v826, 4294901760
    %v1146 = vsub.f32 %v826, %v1145
    %1147 = vmatpush.msra.mxu0 %v1146
    %v1148 = vand.u32 %v825, 4294901760
    %v1149 = vsub.f32 %v825, %v1148
    %1150 = vmatpush.msra.mxu0 %v1149
    %v1151 = vand.u32 %v830, 4294901760
    %v1152 = vsub.f32 %v830, %v1151
    %1153 = vmatmul.f32.gmra.mxu0 %v1152
    %v1154 = vpop.f32.mrf.mxu0
    %v1155 = vadd.f32 %v1065, %v1154
    %v1156 = vand.u32 %v833, 4294901760
    %v1157 = vsub.f32 %v833, %v1156
    %1158 = vmatmul.f32.gmra.mxu0 %v1157
    %v1159 = vpop.f32.mrf.mxu0
    %v1160 = vadd.f32 %v1069, %v1159
    %v1161 = vand.u32 %v836, 4294901760
    %v1162 = vsub.f32 %v836, %v1161
    %1163 = vmatmul.f32.gmra.mxu0 %v1162
    %v1164 = vpop.f32.mrf.mxu0
    %v1165 = vadd.f32 %v1073, %v1164
    %v1166 = vand.u32 %v839, 4294901760
    %v1167 = vsub.f32 %v839, %v1166
    %1168 = vmatmul.f32.gmra.mxu0 %v1167
    %v1169 = vpop.f32.mrf.mxu0
    %v1170 = vadd.f32 %v1077, %v1169
    %v1171 = vand.u32 %v842, 4294901760
    %v1172 = vsub.f32 %v842, %v1171
    %1173 = vmatmul.f32.gmra.mxu0 %v1172
    %v1174 = vpop.f32.mrf.mxu0
    %v1175 = vadd.f32 %v1081, %v1174
    %v1176 = vand.u32 %v845, 4294901760
    %v1177 = vsub.f32 %v845, %v1176
    %1178 = vmatmul.f32.gmra.mxu0 %v1177
    %v1179 = vpop.f32.mrf.mxu0
    %v1180 = vadd.f32 %v1085, %v1179
    %v1181 = vand.u32 %v848, 4294901760
    %v1182 = vsub.f32 %v848, %v1181
    %1183 = vmatmul.f32.gmra.mxu0 %v1182
    %v1184 = vpop.f32.mrf.mxu0
    %v1185 = vadd.f32 %v1089, %v1184
    %v1186 = vand.u32 %v851, 4294901760
    %v1187 = vsub.f32 %v851, %v1186
    %1188 = vmatmul.f32.gmra.mxu0 %v1187
    %v1189 = vpop.f32.mrf.mxu0
    %v1190 = vadd.f32 %v1093, %v1189
    %v1191 = vand.u32 %v854, 4294901760
    %v1192 = vsub.f32 %v854, %v1191
    %1193 = vmatmul.f32.gmra.mxu0 %v1192
    %v1194 = vpop.f32.mrf.mxu0
    %v1195 = vadd.f32 %v1097, %v1194
    %v1196 = vand.u32 %v857, 4294901760
    %v1197 = vsub.f32 %v857, %v1196
    %1198 = vmatmul.f32.gmra.mxu0 %v1197
    %v1199 = vpop.f32.mrf.mxu0
    %v1200 = vadd.f32 %v1101, %v1199
    %v1201 = vand.u32 %v860, 4294901760
    %v1202 = vsub.f32 %v860, %v1201
    %1203 = vmatmul.f32.gmra.mxu0 %v1202
    %v1204 = vpop.f32.mrf.mxu0
    %v1205 = vadd.f32 %v1105, %v1204
    %v1206 = vand.u32 %v863, 4294901760
    %v1207 = vsub.f32 %v863, %v1206
    %1208 = vmatmul.f32.gmra.mxu0 %v1207
    %v1209 = vpop.f32.mrf.mxu0
    %v1210 = vadd.f32 %v1109, %v1209
    %v1211 = vand.u32 %v866, 4294901760
    %v1212 = vsub.f32 %v866, %v1211
    %1213 = vmatmul.f32.gmra.mxu0 %v1212
    %v1214 = vpop.f32.mrf.mxu0
    %v1215 = vadd.f32 %v1113, %v1214
    %v1216 = vand.u32 %v869, 4294901760
    %v1217 = vsub.f32 %v869, %v1216
    %1218 = vmatmul.f32.gmra.mxu0 %v1217
    %v1219 = vpop.f32.mrf.mxu0
    %v1220 = vadd.f32 %v1117, %v1219
    %v1221 = vand.u32 %v872, 4294901760
    %v1222 = vsub.f32 %v872, %v1221
    %1223 = vmatmul.f32.gmra.mxu0 %v1222
    %v1224 = vpop.f32.mrf.mxu0
    %v1225 = vadd.f32 %v1121, %v1224
    %v1226 = vand.u32 %v875, 4294901760
    %v1227 = vsub.f32 %v875, %v1226
    %1228 = vmatmul.f32.gmra.mxu0 %v1227
    %v1229 = vpop.f32.mrf.mxu0
    %v1230 = vadd.f32 %v1125, %v1229
    %1231 = vdwg.mxu0
    %1232 = vmatpush.msra.mxu0 0.0
    %1233 = vmatpush.msra.mxu0 0.0
    %1234 = vmatpush.msra.mxu0 0.0
    %1235 = vmatpush.msra.mxu0 0.0
    %1236 = vmatpush.msra.mxu0 0.0
    %1237 = vmatpush.msra.mxu0 0.0
    %1238 = vmatpush.msra.mxu0 0.0
    %1239 = vmatpush.msra.mxu0 0.0
    %1240 = vmatpush.msra.mxu0 0.0
    %1241 = vmatpush.msra.mxu0 0.0
    %1242 = vmatpush.msra.mxu0 0.0
    %1243 = vmatpush.msra.mxu0 0.0
    %v1244 = vand.u32 %v828, 4294901760
    %1245 = vmatpush.msra.mxu0 %v1244
    %v1246 = vand.u32 %v827, 4294901760
    %1247 = vmatpush.msra.mxu0 %v1246
    %v1248 = vand.u32 %v826, 4294901760
    %1249 = vmatpush.msra.mxu0 %v1248
    %v1250 = vand.u32 %v825, 4294901760
    %1251 = vmatpush.msra.mxu0 %v1250
    %v1252 = vand.u32 %v830, 4294901760
    %v1253 = vsub.f32 %v830, %v1252
    %v1254 = vand.u32 %v1253, 4294901760
    %1255 = vmatmul.f32.gmra.mxu0 %v1254
    %v1256 = vpop.f32.mrf.mxu0
    %v1257 = vadd.f32 %v1155, %v1256
    %v1258 = vand.u32 %v833, 4294901760
    %v1259 = vsub.f32 %v833, %v1258
    %v1260 = vand.u32 %v1259, 4294901760
    %1261 = vmatmul.f32.gmra.mxu0 %v1260
    %v1262 = vpop.f32.mrf.mxu0
    %v1263 = vadd.f32 %v1160, %v1262
    %v1264 = vand.u32 %v836, 4294901760
    %v1265 = vsub.f32 %v836, %v1264
    %v1266 = vand.u32 %v1265, 4294901760
    %1267 = vmatmul.f32.gmra.mxu0 %v1266
    %v1268 = vpop.f32.mrf.mxu0
    %v1269 = vadd.f32 %v1165, %v1268
    %v1270 = vand.u32 %v839, 4294901760
    %v1271 = vsub.f32 %v839, %v1270
    %v1272 = vand.u32 %v1271, 4294901760
    %1273 = vmatmul.f32.gmra.mxu0 %v1272
    %v1274 = vpop.f32.mrf.mxu0
    %v1275 = vadd.f32 %v1170, %v1274
    %v1276 = vand.u32 %v842, 4294901760
    %v1277 = vsub.f32 %v842, %v1276
    %v1278 = vand.u32 %v1277, 4294901760
    %1279 = vmatmul.f32.gmra.mxu0 %v1278
    %v1280 = vpop.f32.mrf.mxu0
    %v1281 = vadd.f32 %v1175, %v1280
    %v1282 = vand.u32 %v845, 4294901760
    %v1283 = vsub.f32 %v845, %v1282
    %v1284 = vand.u32 %v1283, 4294901760
    %1285 = vmatmul.f32.gmra.mxu0 %v1284
    %v1286 = vpop.f32.mrf.mxu0
    %v1287 = vadd.f32 %v1180, %v1286
    %v1288 = vand.u32 %v848, 4294901760
    %v1289 = vsub.f32 %v848, %v1288
    %v1290 = vand.u32 %v1289, 4294901760
    %1291 = vmatmul.f32.gmra.mxu0 %v1290
    %v1292 = vpop.f32.mrf.mxu0
    %v1293 = vadd.f32 %v1185, %v1292
    %v1294 = vand.u32 %v851, 4294901760
    %v1295 = vsub.f32 %v851, %v1294
    %v1296 = vand.u32 %v1295, 4294901760
    %1297 = vmatmul.f32.gmra.mxu0 %v1296
    %v1298 = vpop.f32.mrf.mxu0
    %v1299 = vadd.f32 %v1190, %v1298
    %v1300 = vand.u32 %v854, 4294901760
    %v1301 = vsub.f32 %v854, %v1300
    %v1302 = vand.u32 %v1301, 4294901760
    %1303 = vmatmul.f32.gmra.mxu0 %v1302
    %v1304 = vpop.f32.mrf.mxu0
    %v1305 = vadd.f32 %v1195, %v1304
    %v1306 = vand.u32 %v857, 4294901760
    %v1307 = vsub.f32 %v857, %v1306
    %v1308 = vand.u32 %v1307, 4294901760
    %1309 = vmatmul.f32.gmra.mxu0 %v1308
    %v1310 = vpop.f32.mrf.mxu0
    %v1311 = vadd.f32 %v1200, %v1310
    %v1312 = vand.u32 %v860, 4294901760
    %v1313 = vsub.f32 %v860, %v1312
    %v1314 = vand.u32 %v1313, 4294901760
    %1315 = vmatmul.f32.gmra.mxu0 %v1314
    %v1316 = vpop.f32.mrf.mxu0
    %v1317 = vadd.f32 %v1205, %v1316
    %v1318 = vand.u32 %v863, 4294901760
    %v1319 = vsub.f32 %v863, %v1318
    %v1320 = vand.u32 %v1319, 4294901760
    %1321 = vmatmul.f32.gmra.mxu0 %v1320
    %v1322 = vpop.f32.mrf.mxu0
    %v1323 = vadd.f32 %v1210, %v1322
    %v1324 = vand.u32 %v866, 4294901760
    %v1325 = vsub.f32 %v866, %v1324
    %v1326 = vand.u32 %v1325, 4294901760
    %1327 = vmatmul.f32.gmra.mxu0 %v1326
    %v1328 = vpop.f32.mrf.mxu0
    %v1329 = vadd.f32 %v1215, %v1328
    %v1330 = vand.u32 %v869, 4294901760
    %v1331 = vsub.f32 %v869, %v1330
    %v1332 = vand.u32 %v1331, 4294901760
    %1333 = vmatmul.f32.gmra.mxu0 %v1332
    %v1334 = vpop.f32.mrf.mxu0
    %v1335 = vadd.f32 %v1220, %v1334
    %v1336 = vand.u32 %v872, 4294901760
    %v1337 = vsub.f32 %v872, %v1336
    %v1338 = vand.u32 %v1337, 4294901760
    %1339 = vmatmul.f32.gmra.mxu0 %v1338
    %v1340 = vpop.f32.mrf.mxu0
    %v1341 = vadd.f32 %v1225, %v1340
    %v1342 = vand.u32 %v875, 4294901760
    %v1343 = vsub.f32 %v875, %v1342
    %v1344 = vand.u32 %v1343, 4294901760
    %1345 = vmatmul.f32.gmra.mxu0 %v1344
    %v1346 = vpop.f32.mrf.mxu0
    %v1347 = vadd.f32 %v1230, %v1346
    %1348 = vdwg.mxu0
    %1349 = vmatpush.msra.mxu0 0.0
    %1350 = vmatpush.msra.mxu0 0.0
    %1351 = vmatpush.msra.mxu0 0.0
    %1352 = vmatpush.msra.mxu0 0.0
    %1353 = vmatpush.msra.mxu0 0.0
    %1354 = vmatpush.msra.mxu0 0.0
    %1355 = vmatpush.msra.mxu0 0.0
    %1356 = vmatpush.msra.mxu0 0.0
    %1357 = vmatpush.msra.mxu0 0.0
    %1358 = vmatpush.msra.mxu0 0.0
    %1359 = vmatpush.msra.mxu0 0.0
    %1360 = vmatpush.msra.mxu0 0.0
    %v1361 = vand.u32 %v828, 4294901760
    %v1362 = vsub.f32 %v828, %v1361
    %v1363 = vand.u32 %v1362, 4294901760
    %1364 = vmatpush.msra.mxu0 %v1363
    %v1365 = vand.u32 %v827, 4294901760
    %v1366 = vsub.f32 %v827, %v1365
    %v1367 = vand.u32 %v1366, 4294901760
    %1368 = vmatpush.msra.mxu0 %v1367
    %v1369 = vand.u32 %v826, 4294901760
    %v1370 = vsub.f32 %v826, %v1369
    %v1371 = vand.u32 %v1370, 4294901760
    %1372 = vmatpush.msra.mxu0 %v1371
    %v1373 = vand.u32 %v825, 4294901760
    %v1374 = vsub.f32 %v825, %v1373
    %v1375 = vand.u32 %v1374, 4294901760
    %1376 = vmatpush.msra.mxu0 %v1375
    %v1377 = vand.u32 %v830, 4294901760
    %1378 = vmatmul.f32.gmra.mxu0 %v1377
    %v1379 = vpop.f32.mrf.mxu0
    %v1380 = vadd.f32 %v1257, %v1379
    %v1381 = vand.u32 %v833, 4294901760
    %1382 = vmatmul.f32.gmra.mxu0 %v1381
    %v1383 = vpop.f32.mrf.mxu0
    %v1384 = vadd.f32 %v1263, %v1383
    %v1385 = vand.u32 %v836, 4294901760
    %1386 = vmatmul.f32.gmra.mxu0 %v1385
    %v1387 = vpop.f32.mrf.mxu0
    %v1388 = vadd.f32 %v1269, %v1387
    %v1389 = vand.u32 %v839, 4294901760
    %1390 = vmatmul.f32.gmra.mxu0 %v1389
    %v1391 = vpop.f32.mrf.mxu0
    %v1392 = vadd.f32 %v1275, %v1391
    %v1393 = vand.u32 %v842, 4294901760
    %1394 = vmatmul.f32.gmra.mxu0 %v1393
    %v1395 = vpop.f32.mrf.mxu0
    %v1396 = vadd.f32 %v1281, %v1395
    %v1397 = vand.u32 %v845, 4294901760
    %1398 = vmatmul.f32.gmra.mxu0 %v1397
    %v1399 = vpop.f32.mrf.mxu0
    %v1400 = vadd.f32 %v1287, %v1399
    %v1401 = vand.u32 %v848, 4294901760
    %1402 = vmatmul.f32.gmra.mxu0 %v1401
    %v1403 = vpop.f32.mrf.mxu0
    %v1404 = vadd.f32 %v1293, %v1403
    %v1405 = vand.u32 %v851, 4294901760
    %1406 = vmatmul.f32.gmra.mxu0 %v1405
    %v1407 = vpop.f32.mrf.mxu0
    %v1408 = vadd.f32 %v1299, %v1407
    %v1409 = vand.u32 %v854, 4294901760
    %1410 = vmatmul.f32.gmra.mxu0 %v1409
    %v1411 = vpop.f32.mrf.mxu0
    %v1412 = vadd.f32 %v1305, %v1411
    %v1413 = vand.u32 %v857, 4294901760
    %1414 = vmatmul.f32.gmra.mxu0 %v1413
    %v1415 = vpop.f32.mrf.mxu0
    %v1416 = vadd.f32 %v1311, %v1415
    %v1417 = vand.u32 %v860, 4294901760
    %1418 = vmatmul.f32.gmra.mxu0 %v1417
    %v1419 = vpop.f32.mrf.mxu0
    %v1420 = vadd.f32 %v1317, %v1419
    %v1421 = vand.u32 %v863, 4294901760
    %1422 = vmatmul.f32.gmra.mxu0 %v1421
    %v1423 = vpop.f32.mrf.mxu0
    %v1424 = vadd.f32 %v1323, %v1423
    %v1425 = vand.u32 %v866, 4294901760
    %1426 = vmatmul.f32.gmra.mxu0 %v1425
    %v1427 = vpop.f32.mrf.mxu0
    %v1428 = vadd.f32 %v1329, %v1427
    %v1429 = vand.u32 %v869, 4294901760
    %1430 = vmatmul.f32.gmra.mxu0 %v1429
    %v1431 = vpop.f32.mrf.mxu0
    %v1432 = vadd.f32 %v1335, %v1431
    %v1433 = vand.u32 %v872, 4294901760
    %1434 = vmatmul.f32.gmra.mxu0 %v1433
    %v1435 = vpop.f32.mrf.mxu0
    %v1436 = vadd.f32 %v1341, %v1435
    %v1437 = vand.u32 %v875, 4294901760
    %1438 = vmatmul.f32.gmra.mxu0 %v1437
    %v1439 = vpop.f32.mrf.mxu0
    %v1440 = vadd.f32 %v1347, %v1439
    %1441 = vdwg.mxu0
    %1442 = vmatpush.msra.mxu0 0.0
    %1443 = vmatpush.msra.mxu0 0.0
    %1444 = vmatpush.msra.mxu0 0.0
    %1445 = vmatpush.msra.mxu0 0.0
    %1446 = vmatpush.msra.mxu0 0.0
    %1447 = vmatpush.msra.mxu0 0.0
    %1448 = vmatpush.msra.mxu0 0.0
    %1449 = vmatpush.msra.mxu0 0.0
    %1450 = vmatpush.msra.mxu0 0.0
    %1451 = vmatpush.msra.mxu0 0.0
    %1452 = vmatpush.msra.mxu0 0.0
    %1453 = vmatpush.msra.mxu0 0.0
    %v1454 = vand.u32 %v828, 4294901760
    %1455 = vmatpush.msra.mxu0 %v1454
    %v1456 = vand.u32 %v827, 4294901760
    %1457 = vmatpush.msra.mxu0 %v1456
    %v1458 = vand.u32 %v826, 4294901760
    %1459 = vmatpush.msra.mxu0 %v1458
    %v1460 = vand.u32 %v825, 4294901760
    %1461 = vmatpush.msra.mxu0 %v1460
    %v1462 = vand.u32 %v830, 4294901760
    %1463 = vmatmul.f32.gmra.mxu0 %v1462
    %v1464 = vpop.f32.mrf.mxu0
    %v1465 = vadd.f32 %v1380, %v1464
    %v1466 = vand.u32 %v833, 4294901760
    %1467 = vmatmul.f32.gmra.mxu0 %v1466
    %v1468 = vpop.f32.mrf.mxu0
    %v1469 = vadd.f32 %v1384, %v1468
    %v1470 = vand.u32 %v836, 4294901760
    %1471 = vmatmul.f32.gmra.mxu0 %v1470
    %v1472 = vpop.f32.mrf.mxu0
    %v1473 = vadd.f32 %v1388, %v1472
    %v1474 = vand.u32 %v839, 4294901760
    %1475 = vmatmul.f32.gmra.mxu0 %v1474
    %v1476 = vpop.f32.mrf.mxu0
    %v1477 = vadd.f32 %v1392, %v1476
    %v1478 = vand.u32 %v842, 4294901760
    %1479 = vmatmul.f32.gmra.mxu0 %v1478
    %v1480 = vpop.f32.mrf.mxu0
    %v1481 = vadd.f32 %v1396, %v1480
    %v1482 = vand.u32 %v845, 4294901760
    %1483 = vmatmul.f32.gmra.mxu0 %v1482
    %v1484 = vpop.f32.mrf.mxu0
    %v1485 = vadd.f32 %v1400, %v1484
    %v1486 = vand.u32 %v848, 4294901760
    %1487 = vmatmul.f32.gmra.mxu0 %v1486
    %v1488 = vpop.f32.mrf.mxu0
    %v1489 = vadd.f32 %v1404, %v1488
    %v1490 = vand.u32 %v851, 4294901760
    %1491 = vmatmul.f32.gmra.mxu0 %v1490
    %v1492 = vpop.f32.mrf.mxu0
    %v1493 = vadd.f32 %v1408, %v1492
    %v1494 = vand.u32 %v854, 4294901760
    %1495 = vmatmul.f32.gmra.mxu0 %v1494
    %v1496 = vpop.f32.mrf.mxu0
    %v1497 = vadd.f32 %v1412, %v1496
    %v1498 = vand.u32 %v857, 4294901760
    %1499 = vmatmul.f32.gmra.mxu0 %v1498
    %v1500 = vpop.f32.mrf.mxu0
    %v1501 = vadd.f32 %v1416, %v1500
    %v1502 = vand.u32 %v860, 4294901760
    %1503 = vmatmul.f32.gmra.mxu0 %v1502
    %v1504 = vpop.f32.mrf.mxu0
    %v1505 = vadd.f32 %v1420, %v1504
    %v1506 = vand.u32 %v863, 4294901760
    %1507 = vmatmul.f32.gmra.mxu0 %v1506
    %v1508 = vpop.f32.mrf.mxu0
    %v1509 = vadd.f32 %v1424, %v1508
    %v1510 = vand.u32 %v866, 4294901760
    %1511 = vmatmul.f32.gmra.mxu0 %v1510
    %v1512 = vpop.f32.mrf.mxu0
    %v1513 = vadd.f32 %v1428, %v1512
    %v1514 = vand.u32 %v869, 4294901760
    %1515 = vmatmul.f32.gmra.mxu0 %v1514
    %v1516 = vpop.f32.mrf.mxu0
    %v1517 = vadd.f32 %v1432, %v1516
    %v1518 = vand.u32 %v872, 4294901760
    %1519 = vmatmul.f32.gmra.mxu0 %v1518
    %v1520 = vpop.f32.mrf.mxu0
    %v1521 = vadd.f32 %v1436, %v1520
    %v1522 = vand.u32 %v875, 4294901760
    %1523 = vmatmul.f32.gmra.mxu0 %v1522
    %v1524 = vpop.f32.mrf.mxu0
    %v1525 = vadd.f32 %v1440, %v1524
    %1526 = vdwg.mxu0
    %v1527 = vtanh.pop %v1465
    %v1528 = vtanh.pop %v1469
    %v1529 = vtanh.pop %v1473
    %v1530 = vtanh.pop %v1477
    %v1531 = vtanh.pop %v1481
    %v1532 = vtanh.pop %v1485
    %v1533 = vtanh.pop %v1489
    %v1534 = vtanh.pop %v1493
    %v1535 = vtanh.pop %v1497
    %v1536 = vtanh.pop %v1501
    %v1537 = vtanh.pop %v1505
    %v1538 = vtanh.pop %v1509
    %v1539 = vtanh.pop %v1513
    %v1540 = vtanh.pop %v1517
    %v1541 = vtanh.pop %v1521
    %v1542 = vtanh.pop %v1525
    %v1543 = vmul.f32 %v808, 1.442695
    %v1544 = vpow.pop %v1543
    %v1545 = vmul.f32 %v1527, 1.442695
    %v1546 = vpow.pop %v1545
    %v1547 = vmul.f32 %v1528, 1.442695
    %v1548 = vpow.pop %v1547
    %v1549 = vmul.f32 %v1529, 1.442695
    %v1550 = vpow.pop %v1549
    %v1551 = vmul.f32 %v1530, 1.442695
    %v1552 = vpow.pop %v1551
    %v1553 = vmul.f32 %v1531, 1.442695
    %v1554 = vpow.pop %v1553
    %v1555 = vmul.f32 %v1532, 1.442695
    %v1556 = vpow.pop %v1555
    %v1557 = vmul.f32 %v1533, 1.442695
    %v1558 = vpow.pop %v1557
    %v1559 = vmul.f32 %v1534, 1.442695
    %v1560 = vpow.pop %v1559
    %v1561 = vmul.f32 %v1535, 1.442695
    %v1562 = vpow.pop %v1561
    %v1563 = vmul.f32 %v1536, 1.442695
    %v1564 = vpow.pop %v1563
    %v1565 = vmul.f32 %v1537, 1.442695
    %v1566 = vpow.pop %v1565
    %v1567 = vmul.f32 %v1538, 1.442695
    %v1568 = vpow.pop %v1567
    %v1569 = vmul.f32 %v1539, 1.442695
    %v1570 = vpow.pop %v1569
    %v1571 = vmul.f32 %v1540, 1.442695
    %v1572 = vpow.pop %v1571
    %v1573 = vmul.f32 %v1541, 1.442695
    %v1574 = vpow.pop %v1573
    %v1575 = vmul.f32 %v1542, 1.442695
    %v1576 = vpow.pop %v1575
    %v1577 = vsel %vm68, %v1544, 0.0
    %1578 = vadd.xlane.f32.xlu0 %v1577
    %v1579 = vpop.xlane.xlu0 %1578
    %v1580 = vrcp.pop %v1579
    %v1581 = vmul.f32 %v1579, %v1580
    %v1582 = vsub.f32 1.0, %v1581
    %v1583 = vmul.f32 %v1580, %v1582
    %v1584 = vadd.f32 %v1580, %v1583
    %vm1585 = vweird.f32 %v1579
    %vm1586 = vweird.f32 %v1580
    %vm1587 = vmor %vm1585, %vm1586
    %v1588 = vsel %vm1587, %v1580, %v1584
    %v1589 = vand.u32 2147483647, %v1579
    %vm1590 = vcmp.eq.f32.partialorder %v1589, 8.507059e+37
    %v1591 = vand.u32 %v1579, 2147483648
    %v1592 = vor.u32 1.1754944e-38, %v1591
    %v1593 = vsel %vm1590, %v1592, %v1588
    %v1594 = vmul.f32 204.08163, %v1593
    %v1595 = vmul.f32 %v1544, %v1594
    %v1596 = vsel %vm68, %v1546, 0.0
    %1597 = vadd.xlane.f32.xlu0 %v1596
    %v1598 = vpop.xlane.xlu0 %1597
    %v1599 = vsel %vm68, %v1548, 0.0
    %1600 = vadd.xlane.f32.xlu0 %v1599
    %v1601 = vpop.xlane.xlu0 %1600
    %v1602 = vsel %vm68, %v1550, 0.0
    %1603 = vadd.xlane.f32.xlu0 %v1602
    %v1604 = vpop.xlane.xlu0 %1603
    %v1605 = vsel %vm68, %v1552, 0.0
    %1606 = vadd.xlane.f32.xlu0 %v1605
    %v1607 = vpop.xlane.xlu0 %1606
    %v1608 = vsel %vm68, %v1554, 0.0
    %1609 = vadd.xlane.f32.xlu0 %v1608
    %v1610 = vpop.xlane.xlu0 %1609
    %v1611 = vsel %vm68, %v1556, 0.0
    %1612 = vadd.xlane.f32.xlu0 %v1611
    %v1613 = vpop.xlane.xlu0 %1612
    %v1614 = vsel %vm68, %v1558, 0.0
    %1615 = vadd.xlane.f32.xlu0 %v1614
    %v1616 = vpop.xlane.xlu0 %1615
    %v1617 = vsel %vm68, %v1560, 0.0
    %1618 = vadd.xlane.f32.xlu0 %v1617
    %v1619 = vpop.xlane.xlu0 %1618
    %v1620 = vsel %vm68, %v1562, 0.0
    %1621 = vadd.xlane.f32.xlu0 %v1620
    %v1622 = vpop.xlane.xlu0 %1621
    %v1623 = vsel %vm68, %v1564, 0.0
    %1624 = vadd.xlane.f32.xlu0 %v1623
    %v1625 = vpop.xlane.xlu0 %1624
    %v1626 = vsel %vm68, %v1566, 0.0
    %1627 = vadd.xlane.f32.xlu0 %v1626
    %v1628 = vpop.xlane.xlu0 %1627
    %v1629 = vsel %vm68, %v1568, 0.0
    %1630 = vadd.xlane.f32.xlu0 %v1629
    %v1631 = vpop.xlane.xlu0 %1630
    %v1632 = vsel %vm68, %v1570, 0.0
    %1633 = vadd.xlane.f32.xlu0 %v1632
    %v1634 = vpop.xlane.xlu0 %1633
    %v1635 = vsel %vm68, %v1572, 0.0
    %1636 = vadd.xlane.f32.xlu0 %v1635
    %v1637 = vpop.xlane.xlu0 %1636
    %v1638 = vsel %vm68, %v1574, 0.0
    %1639 = vadd.xlane.f32.xlu0 %v1638
    %v1640 = vpop.xlane.xlu0 %1639
    %v1641 = vsel %vm68, %v1576, 0.0
    %1642 = vadd.xlane.f32.xlu0 %v1641
    %v1643 = vpop.xlane.xlu0 %1642
    %v1644 = vrcp.pop %v1598
    %v1645 = vmul.f32 %v1598, %v1644
    %v1646 = vsub.f32 1.0, %v1645
    %v1647 = vmul.f32 %v1644, %v1646
    %v1648 = vadd.f32 %v1644, %v1647
    %vm1649 = vweird.f32 %v1598
    %vm1650 = vweird.f32 %v1644
    %vm1651 = vmor %vm1649, %vm1650
    %v1652 = vsel %vm1651, %v1644, %v1648
    %v1653 = vand.u32 2147483647, %v1598
    %vm1654 = vcmp.eq.f32.partialorder %v1653, 8.507059e+37
    %v1655 = vand.u32 %v1598, 2147483648
    %v1656 = vor.u32 1.1754944e-38, %v1655
    %v1657 = vsel %vm1654, %v1656, %v1652
    %v1658 = vmul.f32 %v1546, %v1657
    %v1659 = vrcp.pop %v1601
    %v1660 = vmul.f32 %v1601, %v1659
    %v1661 = vsub.f32 1.0, %v1660
    %v1662 = vmul.f32 %v1659, %v1661
    %v1663 = vadd.f32 %v1659, %v1662
    %vm1664 = vweird.f32 %v1601
    %vm1665 = vweird.f32 %v1659
    %vm1666 = vmor %vm1664, %vm1665
    %v1667 = vsel %vm1666, %v1659, %v1663
    %v1668 = vand.u32 2147483647, %v1601
    %vm1669 = vcmp.eq.f32.partialorder %v1668, 8.507059e+37
    %v1670 = vand.u32 %v1601, 2147483648
    %v1671 = vor.u32 1.1754944e-38, %v1670
    %v1672 = vsel %vm1669, %v1671, %v1667
    %v1673 = vmul.f32 %v1548, %v1672
    %v1674 = vrcp.pop %v1604
    %v1675 = vmul.f32 %v1604, %v1674
    %v1676 = vsub.f32 1.0, %v1675
    %v1677 = vmul.f32 %v1674, %v1676
    %v1678 = vadd.f32 %v1674, %v1677
    %vm1679 = vweird.f32 %v1604
    %vm1680 = vweird.f32 %v1674
    %vm1681 = vmor %vm1679, %vm1680
    %v1682 = vsel %vm1681, %v1674, %v1678
    %v1683 = vand.u32 2147483647, %v1604
    %vm1684 = vcmp.eq.f32.partialorder %v1683, 8.507059e+37
    %v1685 = vand.u32 %v1604, 2147483648
    %v1686 = vor.u32 1.1754944e-38, %v1685
    %v1687 = vsel %vm1684, %v1686, %v1682
    %v1688 = vmul.f32 %v1550, %v1687
    %v1689 = vrcp.pop %v1607
    %v1690 = vmul.f32 %v1607, %v1689
    %v1691 = vsub.f32 1.0, %v1690
    %v1692 = vmul.f32 %v1689, %v1691
    %v1693 = vadd.f32 %v1689, %v1692
    %vm1694 = vweird.f32 %v1607
    %vm1695 = vweird.f32 %v1689
    %vm1696 = vmor %vm1694, %vm1695
    %v1697 = vsel %vm1696, %v1689, %v1693
    %v1698 = vand.u32 2147483647, %v1607
    %vm1699 = vcmp.eq.f32.partialorder %v1698, 8.507059e+37
    %v1700 = vand.u32 %v1607, 2147483648
    %v1701 = vor.u32 1.1754944e-38, %v1700
    %v1702 = vsel %vm1699, %v1701, %v1697
    %v1703 = vmul.f32 %v1552, %v1702
    %v1704 = vrcp.pop %v1610
    %v1705 = vmul.f32 %v1610, %v1704
    %v1706 = vsub.f32 1.0, %v1705
    %v1707 = vmul.f32 %v1704, %v1706
    %v1708 = vadd.f32 %v1704, %v1707
    %vm1709 = vweird.f32 %v1610
    %vm1710 = vweird.f32 %v1704
    %vm1711 = vmor %vm1709, %vm1710
    %v1712 = vsel %vm1711, %v1704, %v1708
    %v1713 = vand.u32 2147483647, %v1610
    %vm1714 = vcmp.eq.f32.partialorder %v1713, 8.507059e+37
    %v1715 = vand.u32 %v1610, 2147483648
    %v1716 = vor.u32 1.1754944e-38, %v1715
    %v1717 = vsel %vm1714, %v1716, %v1712
    %v1718 = vmul.f32 %v1554, %v1717
    %v1719 = vrcp.pop %v1613
    %v1720 = vmul.f32 %v1613, %v1719
    %v1721 = vsub.f32 1.0, %v1720
    %v1722 = vmul.f32 %v1719, %v1721
    %v1723 = vadd.f32 %v1719, %v1722
    %vm1724 = vweird.f32 %v1613
    %vm1725 = vweird.f32 %v1719
    %vm1726 = vmor %vm1724, %vm1725
    %v1727 = vsel %vm1726, %v1719, %v1723
    %v1728 = vand.u32 2147483647, %v1613
    %vm1729 = vcmp.eq.f32.partialorder %v1728, 8.507059e+37
    %v1730 = vand.u32 %v1613, 2147483648
    %v1731 = vor.u32 1.1754944e-38, %v1730
    %v1732 = vsel %vm1729, %v1731, %v1727
    %v1733 = vmul.f32 %v1556, %v1732
    %v1734 = vrcp.pop %v1616
    %v1735 = vmul.f32 %v1616, %v1734
    %v1736 = vsub.f32 1.0, %v1735
    %v1737 = vmul.f32 %v1734, %v1736
    %v1738 = vadd.f32 %v1734, %v1737
    %vm1739 = vweird.f32 %v1616
    %vm1740 = vweird.f32 %v1734
    %vm1741 = vmor %vm1739, %vm1740
    %v1742 = vsel %vm1741, %v1734, %v1738
    %v1743 = vand.u32 2147483647, %v1616
    %vm1744 = vcmp.eq.f32.partialorder %v1743, 8.507059e+37
    %v1745 = vand.u32 %v1616, 2147483648
    %v1746 = vor.u32 1.1754944e-38, %v1745
    %v1747 = vsel %vm1744, %v1746, %v1742
    %v1748 = vmul.f32 %v1558, %v1747
    %v1749 = vrcp.pop %v1619
    %v1750 = vmul.f32 %v1619, %v1749
    %v1751 = vsub.f32 1.0, %v1750
    %v1752 = vmul.f32 %v1749, %v1751
    %v1753 = vadd.f32 %v1749, %v1752
    %vm1754 = vweird.f32 %v1619
    %vm1755 = vweird.f32 %v1749
    %vm1756 = vmor %vm1754, %vm1755
    %v1757 = vsel %vm1756, %v1749, %v1753
    %v1758 = vand.u32 2147483647, %v1619
    %vm1759 = vcmp.eq.f32.partialorder %v1758, 8.507059e+37
    %v1760 = vand.u32 %v1619, 2147483648
    %v1761 = vor.u32 1.1754944e-38, %v1760
    %v1762 = vsel %vm1759, %v1761, %v1757
    %v1763 = vmul.f32 %v1560, %v1762
    %v1764 = vrcp.pop %v1622
    %v1765 = vmul.f32 %v1622, %v1764
    %v1766 = vsub.f32 1.0, %v1765
    %v1767 = vmul.f32 %v1764, %v1766
    %v1768 = vadd.f32 %v1764, %v1767
    %vm1769 = vweird.f32 %v1622
    %vm1770 = vweird.f32 %v1764
    %vm1771 = vmor %vm1769, %vm1770
    %v1772 = vsel %vm1771, %v1764, %v1768
    %v1773 = vand.u32 2147483647, %v1622
    %vm1774 = vcmp.eq.f32.partialorder %v1773, 8.507059e+37
    %v1775 = vand.u32 %v1622, 2147483648
    %v1776 = vor.u32 1.1754944e-38, %v1775
    %v1777 = vsel %vm1774, %v1776, %v1772
    %v1778 = vmul.f32 %v1562, %v1777
    %v1779 = vrcp.pop %v1625
    %v1780 = vmul.f32 %v1625, %v1779
    %v1781 = vsub.f32 1.0, %v1780
    %v1782 = vmul.f32 %v1779, %v1781
    %v1783 = vadd.f32 %v1779, %v1782
    %vm1784 = vweird.f32 %v1625
    %vm1785 = vweird.f32 %v1779
    %vm1786 = vmor %vm1784, %vm1785
    %v1787 = vsel %vm1786, %v1779, %v1783
    %v1788 = vand.u32 2147483647, %v1625
    %vm1789 = vcmp.eq.f32.partialorder %v1788, 8.507059e+37
    %v1790 = vand.u32 %v1625, 2147483648
    %v1791 = vor.u32 1.1754944e-38, %v1790
    %v1792 = vsel %vm1789, %v1791, %v1787
    %v1793 = vmul.f32 %v1564, %v1792
    %v1794 = vrcp.pop %v1628
    %v1795 = vmul.f32 %v1628, %v1794
    %v1796 = vsub.f32 1.0, %v1795
    %v1797 = vmul.f32 %v1794, %v1796
    %v1798 = vadd.f32 %v1794, %v1797
    %vm1799 = vweird.f32 %v1628
    %vm1800 = vweird.f32 %v1794
    %vm1801 = vmor %vm1799, %vm1800
    %v1802 = vsel %vm1801, %v1794, %v1798
    %v1803 = vand.u32 2147483647, %v1628
    %vm1804 = vcmp.eq.f32.partialorder %v1803, 8.507059e+37
    %v1805 = vand.u32 %v1628, 2147483648
    %v1806 = vor.u32 1.1754944e-38, %v1805
    %v1807 = vsel %vm1804, %v1806, %v1802
    %v1808 = vmul.f32 %v1566, %v1807
    %v1809 = vrcp.pop %v1631
    %v1810 = vmul.f32 %v1631, %v1809
    %v1811 = vsub.f32 1.0, %v1810
    %v1812 = vmul.f32 %v1809, %v1811
    %v1813 = vadd.f32 %v1809, %v1812
    %vm1814 = vweird.f32 %v1631
    %vm1815 = vweird.f32 %v1809
    %vm1816 = vmor %vm1814, %vm1815
    %v1817 = vsel %vm1816, %v1809, %v1813
    %v1818 = vand.u32 2147483647, %v1631
    %vm1819 = vcmp.eq.f32.partialorder %v1818, 8.507059e+37
    %v1820 = vand.u32 %v1631, 2147483648
    %v1821 = vor.u32 1.1754944e-38, %v1820
    %v1822 = vsel %vm1819, %v1821, %v1817
    %v1823 = vmul.f32 %v1568, %v1822
    %v1824 = vrcp.pop %v1634
    %v1825 = vmul.f32 %v1634, %v1824
    %v1826 = vsub.f32 1.0, %v1825
    %v1827 = vmul.f32 %v1824, %v1826
    %v1828 = vadd.f32 %v1824, %v1827
    %vm1829 = vweird.f32 %v1634
    %vm1830 = vweird.f32 %v1824
    %vm1831 = vmor %vm1829, %vm1830
    %v1832 = vsel %vm1831, %v1824, %v1828
    %v1833 = vand.u32 2147483647, %v1634
    %vm1834 = vcmp.eq.f32.partialorder %v1833, 8.507059e+37
    %v1835 = vand.u32 %v1634, 2147483648
    %v1836 = vor.u32 1.1754944e-38, %v1835
    %v1837 = vsel %vm1834, %v1836, %v1832
    %v1838 = vmul.f32 %v1570, %v1837
    %v1839 = vrcp.pop %v1637
    %v1840 = vmul.f32 %v1637, %v1839
    %v1841 = vsub.f32 1.0, %v1840
    %v1842 = vmul.f32 %v1839, %v1841
    %v1843 = vadd.f32 %v1839, %v1842
    %vm1844 = vweird.f32 %v1637
    %vm1845 = vweird.f32 %v1839
    %vm1846 = vmor %vm1844, %vm1845
    %v1847 = vsel %vm1846, %v1839, %v1843
    %v1848 = vand.u32 2147483647, %v1637
    %vm1849 = vcmp.eq.f32.partialorder %v1848, 8.507059e+37
    %v1850 = vand.u32 %v1637, 2147483648
    %v1851 = vor.u32 1.1754944e-38, %v1850
    %v1852 = vsel %vm1849, %v1851, %v1847
    %v1853 = vmul.f32 %v1572, %v1852
    %v1854 = vrcp.pop %v1640
    %v1855 = vmul.f32 %v1640, %v1854
    %v1856 = vsub.f32 1.0, %v1855
    %v1857 = vmul.f32 %v1854, %v1856
    %v1858 = vadd.f32 %v1854, %v1857
    %vm1859 = vweird.f32 %v1640
    %vm1860 = vweird.f32 %v1854
    %vm1861 = vmor %vm1859, %vm1860
    %v1862 = vsel %vm1861, %v1854, %v1858
    %v1863 = vand.u32 2147483647, %v1640
    %vm1864 = vcmp.eq.f32.partialorder %v1863, 8.507059e+37
    %v1865 = vand.u32 %v1640, 2147483648
    %v1866 = vor.u32 1.1754944e-38, %v1865
    %v1867 = vsel %vm1864, %v1866, %v1862
    %v1868 = vmul.f32 %v1574, %v1867
    %v1869 = vrcp.pop %v1643
    %v1870 = vmul.f32 %v1643, %v1869
    %v1871 = vsub.f32 1.0, %v1870
    %v1872 = vmul.f32 %v1869, %v1871
    %v1873 = vadd.f32 %v1869, %v1872
    %vm1874 = vweird.f32 %v1643
    %vm1875 = vweird.f32 %v1869
    %vm1876 = vmor %vm1874, %vm1875
    %v1877 = vsel %vm1876, %v1869, %v1873
    %v1878 = vand.u32 2147483647, %v1643
    %vm1879 = vcmp.eq.f32.partialorder %v1878, 8.507059e+37
    %v1880 = vand.u32 %v1643, 2147483648
    %v1881 = vor.u32 1.1754944e-38, %v1880
    %v1882 = vsel %vm1879, %v1881, %v1877
    %v1883 = vmul.f32 %v1576, %v1882
    %v1885 = vsel %vm68, %v1595, 0
    %v1888 = vsel %vm68, %v1658, 0
    %v1891 = vsel %vm68, %v1673, 0
    %v1894 = vsel %vm68, %v1688, 0
    %v1897 = vsel %vm68, %v1703, 0
    %v1900 = vsel %vm68, %v1718, 0
    %v1903 = vsel %vm68, %v1733, 0
    %v1906 = vsel %vm68, %v1748, 0
    %v1909 = vsel %vm68, %v1763, 0
    %v1912 = vsel %vm68, %v1778, 0
    %v1915 = vsel %vm68, %v1793, 0
    %v1918 = vsel %vm68, %v1808, 0
    %v1921 = vsel %vm68, %v1823, 0
    %v1924 = vsel %vm68, %v1838, 0
    %v1927 = vsel %vm68, %v1853, 0
    %v1930 = vsel %vm68, %v1868, 0
    %v1933 = vsel %vm68, %v1883, 0
    %v1935 = vand.u32 %v1933, 4294901760
    %1936 = vmatpush.xpose.msra.mxu0 %v1935
    %v1937 = vand.u32 %v1930, 4294901760
    %1938 = vmatpush.xpose.msra.mxu0 %v1937
    %v1939 = vand.u32 %v1927, 4294901760
    %1940 = vmatpush.xpose.msra.mxu0 %v1939
    %v1941 = vand.u32 %v1924, 4294901760
    %1942 = vmatpush.xpose.msra.mxu0 %v1941
    %v1943 = vand.u32 %v1921, 4294901760
    %1944 = vmatpush.xpose.msra.mxu0 %v1943
    %v1945 = vand.u32 %v1918, 4294901760
    %1946 = vmatpush.xpose.msra.mxu0 %v1945
    %v1947 = vand.u32 %v1915, 4294901760
    %1948 = vmatpush.xpose.msra.mxu0 %v1947
    %v1949 = vand.u32 %v1912, 4294901760
    %1950 = vmatpush.xpose.msra.mxu0 %v1949
    %v1951 = vand.u32 %v1909, 4294901760
    %1952 = vmatpush.xpose.msra.mxu0 %v1951
    %v1953 = vand.u32 %v1906, 4294901760
    %1954 = vmatpush.xpose.msra.mxu0 %v1953
    %v1955 = vand.u32 %v1903, 4294901760
    %1956 = vmatpush.xpose.msra.mxu0 %v1955
    %v1957 = vand.u32 %v1900, 4294901760
    %1958 = vmatpush.xpose.msra.mxu0 %v1957
    %v1959 = vand.u32 %v1897, 4294901760
    %1960 = vmatpush.xpose.msra.mxu0 %v1959
    %v1961 = vand.u32 %v1894, 4294901760
    %1962 = vmatpush.xpose.msra.mxu0 %v1961
    %v1963 = vand.u32 %v1891, 4294901760
    %1964 = vmatpush.xpose.msra.mxu0 %v1963
    %v1965 = vand.u32 %v1888, 4294901760
    %1966 = vmatpush.xpose.msra.mxu0 %v1965
    %v1967 = vand.u32 %v1885, 4294901760
    %v1968 = vsub.f32 %v1885, %v1967
    %v1969 = vand.u32 %v1968, 4294901760
    %v1970 = vsub.f32 %v1968, %v1969
    %v1971 = vand.u32 %v1970, 4294901760
    %1972 = vmatmul.f32.gmra.mxu0 %v1971
    %v1973 = vpop.f32.mrf.mxu0
    %v1974 = vadd.f32 0.0, %v1973
    %1975 = vdwg.mxu0
    %v1976 = vand.u32 %v1933, 4294901760
    %v1977 = vsub.f32 %v1933, %v1976
    %v1978 = vand.u32 %v1977, 4294901760
    %v1979 = vsub.f32 %v1977, %v1978
    %v1980 = vand.u32 %v1979, 4294901760
    %1981 = vmatpush.xpose.msra.mxu0 %v1980
    %v1982 = vand.u32 %v1930, 4294901760
    %v1983 = vsub.f32 %v1930, %v1982
    %v1984 = vand.u32 %v1983, 4294901760
    %v1985 = vsub.f32 %v1983, %v1984
    %v1986 = vand.u32 %v1985, 4294901760
    %1987 = vmatpush.xpose.msra.mxu0 %v1986
    %v1988 = vand.u32 %v1927, 4294901760
    %v1989 = vsub.f32 %v1927, %v1988
    %v1990 = vand.u32 %v1989, 4294901760
    %v1991 = vsub.f32 %v1989, %v1990
    %v1992 = vand.u32 %v1991, 4294901760
    %1993 = vmatpush.xpose.msra.mxu0 %v1992
    %v1994 = vand.u32 %v1924, 4294901760
    %v1995 = vsub.f32 %v1924, %v1994
    %v1996 = vand.u32 %v1995, 4294901760
    %v1997 = vsub.f32 %v1995, %v1996
    %v1998 = vand.u32 %v1997, 4294901760
    %1999 = vmatpush.xpose.msra.mxu0 %v1998
    %v2000 = vand.u32 %v1921, 4294901760
    %v2001 = vsub.f32 %v1921, %v2000
    %v2002 = vand.u32 %v2001, 4294901760
    %v2003 = vsub.f32 %v2001, %v2002
    %v2004 = vand.u32 %v2003, 4294901760
    %2005 = vmatpush.xpose.msra.mxu0 %v2004
    %v2006 = vand.u32 %v1918, 4294901760
    %v2007 = vsub.f32 %v1918, %v2006
    %v2008 = vand.u32 %v2007, 4294901760
    %v2009 = vsub.f32 %v2007, %v2008
    %v2010 = vand.u32 %v2009, 4294901760
    %2011 = vmatpush.xpose.msra.mxu0 %v2010
    %v2012 = vand.u32 %v1915, 4294901760
    %v2013 = vsub.f32 %v1915, %v2012
    %v2014 = vand.u32 %v2013, 4294901760
    %v2015 = vsub.f32 %v2013, %v2014
    %v2016 = vand.u32 %v2015, 4294901760
    %2017 = vmatpush.xpose.msra.mxu0 %v2016
    %v2018 = vand.u32 %v1912, 4294901760
    %v2019 = vsub.f32 %v1912, %v2018
    %v2020 = vand.u32 %v2019, 4294901760
    %v2021 = vsub.f32 %v2019, %v2020
    %v2022 = vand.u32 %v2021, 4294901760
    %2023 = vmatpush.xpose.msra.mxu0 %v2022
    %v2024 = vand.u32 %v1909, 4294901760
    %v2025 = vsub.f32 %v1909, %v2024
    %v2026 = vand.u32 %v2025, 4294901760
    %v2027 = vsub.f32 %v2025, %v2026
    %v2028 = vand.u32 %v2027, 4294901760
    %2029 = vmatpush.xpose.msra.mxu0 %v2028
    %v2030 = vand.u32 %v1906, 4294901760
    %v2031 = vsub.f32 %v1906, %v2030
    %v2032 = vand.u32 %v2031, 4294901760
    %v2033 = vsub.f32 %v2031, %v2032
    %v2034 = vand.u32 %v2033, 4294901760
    %2035 = vmatpush.xpose.msra.mxu0 %v2034
    %v2036 = vand.u32 %v1903, 4294901760
    %v2037 = vsub.f32 %v1903, %v2036
    %v2038 = vand.u32 %v2037, 4294901760
    %v2039 = vsub.f32 %v2037, %v2038
    %v2040 = vand.u32 %v2039, 4294901760
    %2041 = vmatpush.xpose.msra.mxu0 %v2040
    %v2042 = vand.u32 %v1900, 4294901760
    %v2043 = vsub.f32 %v1900, %v2042
    %v2044 = vand.u32 %v2043, 4294901760
    %v2045 = vsub.f32 %v2043, %v2044
    %v2046 = vand.u32 %v2045, 4294901760
    %2047 = vmatpush.xpose.msra.mxu0 %v2046
    %v2048 = vand.u32 %v1897, 4294901760
    %v2049 = vsub.f32 %v1897, %v2048
    %v2050 = vand.u32 %v2049, 4294901760
    %v2051 = vsub.f32 %v2049, %v2050
    %v2052 = vand.u32 %v2051, 4294901760
    %2053 = vmatpush.xpose.msra.mxu0 %v2052
    %v2054 = vand.u32 %v1894, 4294901760
    %v2055 = vsub.f32 %v1894, %v2054
    %v2056 = vand.u32 %v2055, 4294901760
    %v2057 = vsub.f32 %v2055, %v2056
    %v2058 = vand.u32 %v2057, 4294901760
    %2059 = vmatpush.xpose.msra.mxu0 %v2058
    %v2060 = vand.u32 %v1891, 4294901760
    %v2061 = vsub.f32 %v1891, %v2060
    %v2062 = vand.u32 %v2061, 4294901760
    %v2063 = vsub.f32 %v2061, %v2062
    %v2064 = vand.u32 %v2063, 4294901760
    %2065 = vmatpush.xpose.msra.mxu0 %v2064
    %v2066 = vand.u32 %v1888, 4294901760
    %v2067 = vsub.f32 %v1888, %v2066
    %v2068 = vand.u32 %v2067, 4294901760
    %v2069 = vsub.f32 %v2067, %v2068
    %v2070 = vand.u32 %v2069, 4294901760
    %2071 = vmatpush.xpose.msra.mxu0 %v2070
    %v2072 = vand.u32 %v1885, 4294901760
    %2073 = vmatmul.f32.gmra.mxu0 %v2072
    %v2074 = vpop.f32.mrf.mxu0
    %v2075 = vadd.f32 %v1974, %v2074
    %2076 = vdwg.mxu0
    %v2077 = vand.u32 %v1933, 4294901760
    %v2078 = vsub.f32 %v1933, %v2077
    %2079 = vmatpush.xpose.msra.mxu0 %v2078
    %v2080 = vand.u32 %v1930, 4294901760
    %v2081 = vsub.f32 %v1930, %v2080
    %2082 = vmatpush.xpose.msra.mxu0 %v2081
    %v2083 = vand.u32 %v1927, 4294901760
    %v2084 = vsub.f32 %v1927, %v2083
    %2085 = vmatpush.xpose.msra.mxu0 %v2084
    %v2086 = vand.u32 %v1924, 4294901760
    %v2087 = vsub.f32 %v1924, %v2086
    %2088 = vmatpush.xpose.msra.mxu0 %v2087
    %v2089 = vand.u32 %v1921, 4294901760
    %v2090 = vsub.f32 %v1921, %v2089
    %2091 = vmatpush.xpose.msra.mxu0 %v2090
    %v2092 = vand.u32 %v1918, 4294901760
    %v2093 = vsub.f32 %v1918, %v2092
    %2094 = vmatpush.xpose.msra.mxu0 %v2093
    %v2095 = vand.u32 %v1915, 4294901760
    %v2096 = vsub.f32 %v1915, %v2095
    %2097 = vmatpush.xpose.msra.mxu0 %v2096
    %v2098 = vand.u32 %v1912, 4294901760
    %v2099 = vsub.f32 %v1912, %v2098
    %2100 = vmatpush.xpose.msra.mxu0 %v2099
    %v2101 = vand.u32 %v1909, 4294901760
    %v2102 = vsub.f32 %v1909, %v2101
    %2103 = vmatpush.xpose.msra.mxu0 %v2102
    %v2104 = vand.u32 %v1906, 4294901760
    %v2105 = vsub.f32 %v1906, %v2104
    %2106 = vmatpush.xpose.msra.mxu0 %v2105
    %v2107 = vand.u32 %v1903, 4294901760
    %v2108 = vsub.f32 %v1903, %v2107
    %2109 = vmatpush.xpose.msra.mxu0 %v2108
    %v2110 = vand.u32 %v1900, 4294901760
    %v2111 = vsub.f32 %v1900, %v2110
    %2112 = vmatpush.xpose.msra.mxu0 %v2111
    %v2113 = vand.u32 %v1897, 4294901760
    %v2114 = vsub.f32 %v1897, %v2113
    %2115 = vmatpush.xpose.msra.mxu0 %v2114
    %v2116 = vand.u32 %v1894, 4294901760
    %v2117 = vsub.f32 %v1894, %v2116
    %2118 = vmatpush.xpose.msra.mxu0 %v2117
    %v2119 = vand.u32 %v1891, 4294901760
    %v2120 = vsub.f32 %v1891, %v2119
    %2121 = vmatpush.xpose.msra.mxu0 %v2120
    %v2122 = vand.u32 %v1888, 4294901760
    %v2123 = vsub.f32 %v1888, %v2122
    %2124 = vmatpush.xpose.msra.mxu0 %v2123
    %v2125 = vand.u32 %v1885, 4294901760
    %v2126 = vsub.f32 %v1885, %v2125
    %2127 = vmatmul.f32.gmra.mxu0 %v2126
    %v2128 = vpop.f32.mrf.mxu0
    %v2129 = vadd.f32 %v2075, %v2128
    %2130 = vdwg.mxu0
    %v2131 = vand.u32 %v1933, 4294901760
    %2132 = vmatpush.xpose.msra.mxu0 %v2131
    %v2133 = vand.u32 %v1930, 4294901760
    %2134 = vmatpush.xpose.msra.mxu0 %v2133
    %v2135 = vand.u32 %v1927, 4294901760
    %2136 = vmatpush.xpose.msra.mxu0 %v2135
    %v2137 = vand.u32 %v1924, 4294901760
    %2138 = vmatpush.xpose.msra.mxu0 %v2137
    %v2139 = vand.u32 %v1921, 4294901760
    %2140 = vmatpush.xpose.msra.mxu0 %v2139
    %v2141 = vand.u32 %v1918, 4294901760
    %2142 = vmatpush.xpose.msra.mxu0 %v2141
    %v2143 = vand.u32 %v1915, 4294901760
    %2144 = vmatpush.xpose.msra.mxu0 %v2143
    %v2145 = vand.u32 %v1912, 4294901760
    %2146 = vmatpush.xpose.msra.mxu0 %v2145
    %v2147 = vand.u32 %v1909, 4294901760
    %2148 = vmatpush.xpose.msra.mxu0 %v2147
    %v2149 = vand.u32 %v1906, 4294901760
    %2150 = vmatpush.xpose.msra.mxu0 %v2149
    %v2151 = vand.u32 %v1903, 4294901760
    %2152 = vmatpush.xpose.msra.mxu0 %v2151
    %v2153 = vand.u32 %v1900, 4294901760
    %2154 = vmatpush.xpose.msra.mxu0 %v2153
    %v2155 = vand.u32 %v1897, 4294901760
    %2156 = vmatpush.xpose.msra.mxu0 %v2155
    %v2157 = vand.u32 %v1894, 4294901760
    %2158 = vmatpush.xpose.msra.mxu0 %v2157
    %v2159 = vand.u32 %v1891, 4294901760
    %2160 = vmatpush.xpose.msra.mxu0 %v2159
    %v2161 = vand.u32 %v1888, 4294901760
    %2162 = vmatpush.xpose.msra.mxu0 %v2161
    %v2163 = vand.u32 %v1885, 4294901760
    %v2164 = vsub.f32 %v1885, %v2163
    %v2165 = vand.u32 %v2164, 4294901760
    %2166 = vmatmul.f32.gmra.mxu0 %v2165
    %v2167 = vpop.f32.mrf.mxu0
    %v2168 = vadd.f32 %v2129, %v2167
    %2169 = vdwg.mxu0
    %v2170 = vand.u32 %v1933, 4294901760
    %v2171 = vsub.f32 %v1933, %v2170
    %v2172 = vand.u32 %v2171, 4294901760
    %2173 = vmatpush.xpose.msra.mxu0 %v2172
    %v2174 = vand.u32 %v1930, 4294901760
    %v2175 = vsub.f32 %v1930, %v2174
    %v2176 = vand.u32 %v2175, 4294901760
    %2177 = vmatpush.xpose.msra.mxu0 %v2176
    %v2178 = vand.u32 %v1927, 4294901760
    %v2179 = vsub.f32 %v1927, %v2178
    %v2180 = vand.u32 %v2179, 4294901760
    %2181 = vmatpush.xpose.msra.mxu0 %v2180
    %v2182 = vand.u32 %v1924, 4294901760
    %v2183 = vsub.f32 %v1924, %v2182
    %v2184 = vand.u32 %v2183, 4294901760
    %2185 = vmatpush.xpose.msra.mxu0 %v2184
    %v2186 = vand.u32 %v1921, 4294901760
    %v2187 = vsub.f32 %v1921, %v2186
    %v2188 = vand.u32 %v2187, 4294901760
    %2189 = vmatpush.xpose.msra.mxu0 %v2188
    %v2190 = vand.u32 %v1918, 4294901760
    %v2191 = vsub.f32 %v1918, %v2190
    %v2192 = vand.u32 %v2191, 4294901760
    %2193 = vmatpush.xpose.msra.mxu0 %v2192
    %v2194 = vand.u32 %v1915, 4294901760
    %v2195 = vsub.f32 %v1915, %v2194
    %v2196 = vand.u32 %v2195, 4294901760
    %2197 = vmatpush.xpose.msra.mxu0 %v2196
    %v2198 = vand.u32 %v1912, 4294901760
    %v2199 = vsub.f32 %v1912, %v2198
    %v2200 = vand.u32 %v2199, 4294901760
    %2201 = vmatpush.xpose.msra.mxu0 %v2200
    %v2202 = vand.u32 %v1909, 4294901760
    %v2203 = vsub.f32 %v1909, %v2202
    %v2204 = vand.u32 %v2203, 4294901760
    %2205 = vmatpush.xpose.msra.mxu0 %v2204
    %v2206 = vand.u32 %v1906, 4294901760
    %v2207 = vsub.f32 %v1906, %v2206
    %v2208 = vand.u32 %v2207, 4294901760
    %2209 = vmatpush.xpose.msra.mxu0 %v2208
    %v2210 = vand.u32 %v1903, 4294901760
    %v2211 = vsub.f32 %v1903, %v2210
    %v2212 = vand.u32 %v2211, 4294901760
    %2213 = vmatpush.xpose.msra.mxu0 %v2212
    %v2214 = vand.u32 %v1900, 4294901760
    %v2215 = vsub.f32 %v1900, %v2214
    %v2216 = vand.u32 %v2215, 4294901760
    %2217 = vmatpush.xpose.msra.mxu0 %v2216
    %v2218 = vand.u32 %v1897, 4294901760
    %v2219 = vsub.f32 %v1897, %v2218
    %v2220 = vand.u32 %v2219, 4294901760
    %2221 = vmatpush.xpose.msra.mxu0 %v2220
    %v2222 = vand.u32 %v1894, 4294901760
    %v2223 = vsub.f32 %v1894, %v2222
    %v2224 = vand.u32 %v2223, 4294901760
    %2225 = vmatpush.xpose.msra.mxu0 %v2224
    %v2226 = vand.u32 %v1891, 4294901760
    %v2227 = vsub.f32 %v1891, %v2226
    %v2228 = vand.u32 %v2227, 4294901760
    %2229 = vmatpush.xpose.msra.mxu0 %v2228
    %v2230 = vand.u32 %v1888, 4294901760
    %v2231 = vsub.f32 %v1888, %v2230
    %v2232 = vand.u32 %v2231, 4294901760
    %2233 = vmatpush.xpose.msra.mxu0 %v2232
    %v2234 = vand.u32 %v1885, 4294901760
    %2235 = vmatmul.f32.gmra.mxu0 %v2234
    %v2236 = vpop.f32.mrf.mxu0
    %v2237 = vadd.f32 %v2168, %v2236
    %2238 = vdwg.mxu0
    %v2239 = vand.u32 %v1933, 4294901760
    %2240 = vmatpush.xpose.msra.mxu0 %v2239
    %v2241 = vand.u32 %v1930, 4294901760
    %2242 = vmatpush.xpose.msra.mxu0 %v2241
    %v2243 = vand.u32 %v1927, 4294901760
    %2244 = vmatpush.xpose.msra.mxu0 %v2243
    %v2245 = vand.u32 %v1924, 4294901760
    %2246 = vmatpush.xpose.msra.mxu0 %v2245
    %v2247 = vand.u32 %v1921, 4294901760
    %2248 = vmatpush.xpose.msra.mxu0 %v2247
    %v2249 = vand.u32 %v1918, 4294901760
    %2250 = vmatpush.xpose.msra.mxu0 %v2249
    %v2251 = vand.u32 %v1915, 4294901760
    %2252 = vmatpush.xpose.msra.mxu0 %v2251
    %v2253 = vand.u32 %v1912, 4294901760
    %2254 = vmatpush.xpose.msra.mxu0 %v2253
    %v2255 = vand.u32 %v1909, 4294901760
    %2256 = vmatpush.xpose.msra.mxu0 %v2255
    %v2257 = vand.u32 %v1906, 4294901760
    %2258 = vmatpush.xpose.msra.mxu0 %v2257
    %v2259 = vand.u32 %v1903, 4294901760
    %2260 = vmatpush.xpose.msra.mxu0 %v2259
    %v2261 = vand.u32 %v1900, 4294901760
    %2262 = vmatpush.xpose.msra.mxu0 %v2261
    %v2263 = vand.u32 %v1897, 4294901760
    %2264 = vmatpush.xpose.msra.mxu0 %v2263
    %v2265 = vand.u32 %v1894, 4294901760
    %2266 = vmatpush.xpose.msra.mxu0 %v2265
    %v2267 = vand.u32 %v1891, 4294901760
    %2268 = vmatpush.xpose.msra.mxu0 %v2267
    %v2269 = vand.u32 %v1888, 4294901760
    %2270 = vmatpush.xpose.msra.mxu0 %v2269
    %v2271 = vand.u32 %v1885, 4294901760
    %2272 = vmatmul.f32.gmra.mxu0 %v2271
    %v2273 = vpop.f32.mrf.mxu0
    %v2274 = vadd.f32 %v2237, %v2273
    %2275 = vdwg.mxu0
    %v2276 = vlaneseq
    %v2277 = vand.u32 %v2276, 127
    %vm2278 = vcmp.lt.s32.totalorder %v2277, 8
    %v2279 = vsel %vm2278, %v2274, -1e+30
    %2280 = vmax.xlane.f32.xlu0 %v2279
    %v2281 = vpop.xlane.xlu0 %2280
    %v2282 = vsub.f32 %v2279, %v2281
    %v2283 = vmul.f32 %v2282, 1.442695
    %v2284 = vpow.pop %v2283
    %2285 = vadd.xlane.f32.xlu0 %v2284
    %v2286 = vpop.xlane.xlu0 %2285
    %v2287 = vrcp.pop %v2286
    %v2288 = vmul.f32 %v2284, %v2287
    %2289 = vst [vmem:[#allocation10] sm:$0xff] %v2288
    // Predicated region
    $region38: #{tpu_custom_call.1} parent=1 // pred_check
      _
    $region39: #{tpu_custom_call.1} parent=1 // pred_check_branch
      %2291 = sbr.rel (0) target = $region41
    $region40: #{tpu_custom_call.1} parent=1 // pred_region
      %2293 = vsyncadd [#allocation11], 0
      %s2295 = sshll.u32 [#allocation10], 4
      %s2296 = int_to_ptr.vmem [resolvable:$true] %s2295
      %s2297 = sshll.u32 %s14, 4
      %s2298 = int_to_ptr.hbm [resolvable:$true] %s2297
      %2300 = dma.vmem_to_hbm [thread:$0]  %s2296, 128, %s2298, [#allocation11]
    $region41: #{tpu_custom_call.1} parent=1 // pred_fallthru
      _
    // Predicated region
    $region42: #{tpu_custom_call.1} parent=1 // pred_check
      _
    $region43: #{tpu_custom_call.1} parent=1 // pred_check_branch
      %2302 = sbr.rel (0) target = $region45
    $region44: #{tpu_custom_call.1} parent=1 // pred_region
      %2304 = dma.done [#allocation11], 128
    $region45: #{tpu_custom_call.1} parent=1 // pred_fallthru
      _
    %2305 = vsyncpa [#allocation11], 1

</llo_original>
